<compile_context>
chip_gen: v7x
topology: tpu7x:2x2x1
jax: 0.10.0
libtpu: 0.0.40
codegen_flags: <defaults>
</compile_context>

<pallas_src>
import functools

import jax
import jax.numpy as jnp
from jax.experimental import pallas as pl
from jax.experimental.pallas import tpu as pltpu


def _conv5x5s2_sigmoid_kernel(xp_ref, wb_ref, o_ref, *, c_in, h_out, w_out):
    """Composed conv (c_in -> 1, k=5, s=2) + sigmoid, fully unrolled on the VPU.

    xp_ref : (4*c_in, N, H//2, W//2) VMEM
             plane (2*ra + rb)*c_in + c  ==  x[:, c, ra::2, rb::2]
    wb_ref : (25*c_in + 1,) f32 SMEM
             w[c, a, b] at index (c*5 + a)*5 + b ; fused bias at index 25*c_in
    o_ref  : (N, h_out, w_out) VMEM
    """
    acc = None
    for c in range(c_in):
        for a in range(5):
            da, ra = a // 2, a % 2
            for b in range(5):
                db, rb = b // 2, b % 2
                w = wb_ref[(c * 5 + a) * 5 + b]            # scalar from SMEM
                plane = (2 * ra + rb) * c_in + c
                term = xp_ref[plane, :, da:da + h_out, db:db + w_out] * w
                acc = term if acc is None else acc + term
    y = jax.nn.sigmoid(acc + wb_ref[25 * c_in])
    o_ref[...] = y.astype(o_ref.dtype)


def _compose_weights(params):
    """Fold Conv_2 (3->2,k2,s1) -> Conv_1 (2->2,k2,s2) -> Conv_3 (2->1,k2,s1)
    into a single 5x5 stride-2 conv (3->1 ch) + one bias.  Tiny einsums."""
    w2, b2 = params["w2"].astype(jnp.float32), params["b2"].astype(jnp.float32)
    w1, b1 = params["w1"].astype(jnp.float32), params["b1"].astype(jnp.float32)
    w3, b3 = params["w3"].astype(jnp.float32), params["b3"].astype(jnp.float32)

    # Conv_2 (s=1) followed by Conv_1 (s=2)  ->  3x3 kernel, stride 2, 3->2 ch.
    w21 = jnp.zeros((w1.shape[0], w2.shape[1], 3, 3), jnp.float32)
    for ki in range(2):
        for kj in range(2):
            w21 = w21.at[:, :, ki:ki + 2, kj:kj + 2].add(
                jnp.einsum('oc,cihw->oihw', w1[:, :, ki, kj], w2))
    b21 = b1 + jnp.einsum('ocij,c->o', w1, b2)

    # ... followed by Conv_3 (s=1 on the stride-2 grid) -> 5x5, stride 2, 3->1.
    w_eff = jnp.zeros((w3.shape[0], w2.shape[1], 5, 5), jnp.float32)
    for p in range(2):
        for q in range(2):
            w_eff = w_eff.at[:, :, 2 * p:2 * p + 3, 2 * q:2 * q + 3].add(
                jnp.einsum('oc,cihw->oihw', w3[:, :, p, q], w21))
    b_eff = b3 + jnp.einsum('ocij,c->o', w3, b21)
    return w_eff[0], b_eff                       # (C_in, 5, 5), (1,)


def model_forward_pallas(x, params):
    x = x.astype(jnp.float32)
    N, C, H, W = x.shape
    # TODO(synk): odd H/W would need the stride-2 phase selection done in-kernel.
    assert H % 2 == 0 and W % 2 == 0, "phase split assumes even spatial dims"
    assert H >= 5 and W >= 5
    Hp, Wp = H // 2, W // 2
    Ho, Wo = (H - 5) // 2 + 1, (W - 5) // 2 + 1   # == chained-conv output size

    # Single composed weight/bias, packed into one SMEM vector.
    w_eff, b_eff = _compose_weights(params)
    wb = jnp.concatenate([w_eff.reshape(-1), b_eff.reshape(-1)])   # (25*C + 1,)

    # Single fused relayout (reshape->transpose->reshape = one XLA copy):
    # xp[(2*ra + rb)*C + c] == x[:, c, ra::2, rb::2]
    xp = (x.reshape(N, C, Hp, 2, Wp, 2)
           .transpose(3, 5, 1, 0, 2, 4)
           .reshape(4 * C, N, Hp, Wp))

    kernel = functools.partial(
        _conv5x5s2_sigmoid_kernel, c_in=C, h_out=Ho, w_out=Wo)

    smem = pl.BlockSpec(memory_space=pltpu.MemorySpace.SMEM)
    vmem = pl.BlockSpec(memory_space=pltpu.MemorySpace.VMEM)

    out = pl.pallas_call(
        kernel,
        out_shape=jax.ShapeDtypeStruct((N, Ho, Wo), jnp.float32),
        in_specs=[vmem, smem],
        out_specs=vmem,
    )(xp, wb)
    return out.reshape(N, 1, Ho, Wo)


def init_params(key):
    """Deterministic init matching PyTorch Conv2d shapes (uniform +/- 1/sqrt(fan_in))."""
    def conv_init(k, oc, ic, kh, kw):
        k1, k2 = jax.random.split(k)
        bound = 1.0 / (ic * kh * kw) ** 0.5
        w = jax.random.uniform(k1, (oc, ic, kh, kw), jnp.float32, -bound, bound)
        b = jax.random.uniform(k2, (oc,), jnp.float32, -bound, bound)
        return w, b

    k2, k1, k3 = jax.random.split(key, 3)
    w2, b2 = conv_init(k2, 2, 3, 2, 2)   # Conv_2: 3 -> 2, k=2, s=1
    w1, b1 = conv_init(k1, 2, 2, 2, 2)   # Conv_1: 2 -> 2, k=2, s=2
    w3, b3 = conv_init(k3, 1, 2, 2, 2)   # Conv_3: 2 -> 1, k=2, s=1
    return dict(w1=w1, b1=b1, w2=w2, b2=b2, w3=w3, b3=b3)


@jax.jit
def model_forward(x, params):
    return model_forward_pallas(x, params)


@jax.jit
def _reference_forward(x, params):
    dn = ("NCHW", "OIHW", "NCHW")

    def conv(z, w, b, s):
        y = jax.lax.conv_general_dilated(z, w, (s, s), "VALID",
                                         dimension_numbers=dn)
        return y + b.reshape(1, -1, 1, 1)

    t = conv(x, params["w2"], params["b2"], 1)
    t = conv(t, params["w1"], params["b1"], 2)
    t = conv(t, params["w3"], params["b3"], 1)
    return jax.nn.sigmoid(t)


if __name__ == "__main__":
    key = jax.random.PRNGKey(0)
    k_x, k_p = jax.random.split(key)
    x = jax.random.normal(k_x, (2, 3, 16, 16), dtype=jnp.float32)  # NCHW
    params = init_params(k_p)

    out = jax.block_until_ready(model_forward(x, params))

    # Expected shape chain: (2,3,16,16) -> (2,2,15,15) -> (2,2,7,7) -> (2,1,6,6)
    assert out.shape == (2, 1, 6, 6), out.shape
    assert bool(jnp.all(jnp.isfinite(out)))
    assert bool(jnp.all((out >= 0.0) & (out <= 1.0)))  # sigmoid range

    ref = jax.block_until_ready(_reference_forward(x, params))
    assert bool(jnp.allclose(out, ref, atol=1e-4, rtol=1e-4)), \
        "mismatch vs lax.conv reference"

    print("KERNEL_OK")
</pallas_src>

<mosaic_0001>
module attributes {stable_mosaic.version = 11 : i64} {
  func.func @_conv5x5s2_sigmoid_kernel(%arg0: memref<12x2x8x8xf32, #tpu.memory_space<vmem>>, %arg1: memref<76xf32, #tpu.memory_space<smem>>, %arg2: memref<2x6x6xf32, #tpu.memory_space<vmem>>) attributes {dimension_semantics = [], scalar_prefetch = 0 : i64, scratch_operands = 0 : i64, tpu.core_type = #tpu.core_type<tc>} {
    %c0 = arith.constant 0 : index
    %0 = memref.load %arg1[%c0] : memref<76xf32, #tpu.memory_space<smem>>
    %c0_0 = arith.constant 0 : index
    %c0_1 = arith.constant 0 : index
    %c0_2 = arith.constant 0 : index
    %c0_3 = arith.constant 0 : index
    %1 = vector.load %arg0[%c0_0, %c0_1, %c0_2, %c0_3] : memref<12x2x8x8xf32, #tpu.memory_space<vmem>>, vector<1x2x6x6xf32>
    %2 = vector.shape_cast %1 : vector<1x2x6x6xf32> to vector<2x6x6xf32>
    %3 = vector.broadcast %0 : f32 to vector<2x6x6xf32>
    %4 = arith.mulf %2, %3 : vector<2x6x6xf32>
    %c1 = arith.constant 1 : index
    %5 = memref.load %arg1[%c1] : memref<76xf32, #tpu.memory_space<smem>>
    %c3 = arith.constant 3 : index
    %c0_4 = arith.constant 0 : index
    %c0_5 = arith.constant 0 : index
    %c0_6 = arith.constant 0 : index
    %6 = vector.load %arg0[%c3, %c0_4, %c0_5, %c0_6] : memref<12x2x8x8xf32, #tpu.memory_space<vmem>>, vector<1x2x6x6xf32>
    %7 = vector.shape_cast %6 : vector<1x2x6x6xf32> to vector<2x6x6xf32>
    %8 = vector.broadcast %5 : f32 to vector<2x6x6xf32>
    %9 = arith.mulf %7, %8 : vector<2x6x6xf32>
    %10 = arith.addf %4, %9 : vector<2x6x6xf32>
    %c2 = arith.constant 2 : index
    %11 = memref.load %arg1[%c2] : memref<76xf32, #tpu.memory_space<smem>>
    %c0_7 = arith.constant 0 : index
    %c0_8 = arith.constant 0 : index
    %c0_9 = arith.constant 0 : index
    %c1_10 = arith.constant 1 : index
    %12 = vector.load %arg0[%c0_7, %c0_8, %c0_9, %c1_10] : memref<12x2x8x8xf32, #tpu.memory_space<vmem>>, vector<1x2x6x6xf32>
    %13 = vector.shape_cast %12 : vector<1x2x6x6xf32> to vector<2x6x6xf32>
    %14 = vector.broadcast %11 : f32 to vector<2x6x6xf32>
    %15 = arith.mulf %13, %14 : vector<2x6x6xf32>
    %16 = arith.addf %10, %15 : vector<2x6x6xf32>
    %c3_11 = arith.constant 3 : index
    %17 = memref.load %arg1[%c3_11] : memref<76xf32, #tpu.memory_space<smem>>
    %c3_12 = arith.constant 3 : index
    %c0_13 = arith.constant 0 : index
    %c0_14 = arith.constant 0 : index
    %c1_15 = arith.constant 1 : index
    %18 = vector.load %arg0[%c3_12, %c0_13, %c0_14, %c1_15] : memref<12x2x8x8xf32, #tpu.memory_space<vmem>>, vector<1x2x6x6xf32>
    %19 = vector.shape_cast %18 : vector<1x2x6x6xf32> to vector<2x6x6xf32>
    %20 = vector.broadcast %17 : f32 to vector<2x6x6xf32>
    %21 = arith.mulf %19, %20 : vector<2x6x6xf32>
    %22 = arith.addf %16, %21 : vector<2x6x6xf32>
    %c4 = arith.constant 4 : index
    %23 = memref.load %arg1[%c4] : memref<76xf32, #tpu.memory_space<smem>>
    %c0_16 = arith.constant 0 : index
    %c0_17 = arith.constant 0 : index
    %c0_18 = arith.constant 0 : index
    %c2_19 = arith.constant 2 : index
    %24 = vector.load %arg0[%c0_16, %c0_17, %c0_18, %c2_19] : memref<12x2x8x8xf32, #tpu.memory_space<vmem>>, vector<1x2x6x6xf32>
    %25 = vector.shape_cast %24 : vector<1x2x6x6xf32> to vector<2x6x6xf32>
    %26 = vector.broadcast %23 : f32 to vector<2x6x6xf32>
    %27 = arith.mulf %25, %26 : vector<2x6x6xf32>
    %28 = arith.addf %22, %27 : vector<2x6x6xf32>
    %c5 = arith.constant 5 : index
    %29 = memref.load %arg1[%c5] : memref<76xf32, #tpu.memory_space<smem>>
    %c6 = arith.constant 6 : index
    %c0_20 = arith.constant 0 : index
    %c0_21 = arith.constant 0 : index
    %c0_22 = arith.constant 0 : index
    %30 = vector.load %arg0[%c6, %c0_20, %c0_21, %c0_22] : memref<12x2x8x8xf32, #tpu.memory_space<vmem>>, vector<1x2x6x6xf32>
    %31 = vector.shape_cast %30 : vector<1x2x6x6xf32> to vector<2x6x6xf32>
    %32 = vector.broadcast %29 : f32 to vector<2x6x6xf32>
    %33 = arith.mulf %31, %32 : vector<2x6x6xf32>
    %34 = arith.addf %28, %33 : vector<2x6x6xf32>
    %c6_23 = arith.constant 6 : index
    %35 = memref.load %arg1[%c6_23] : memref<76xf32, #tpu.memory_space<smem>>
    %c9 = arith.constant 9 : index
    %c0_24 = arith.constant 0 : index
    %c0_25 = arith.constant 0 : index
    %c0_26 = arith.constant 0 : index
    %36 = vector.load %arg0[%c9, %c0_24, %c0_25, %c0_26] : memref<12x2x8x8xf32, #tpu.memory_space<vmem>>, vector<1x2x6x6xf32>
    %37 = vector.shape_cast %36 : vector<1x2x6x6xf32> to vector<2x6x6xf32>
    %38 = vector.broadcast %35 : f32 to vector<2x6x6xf32>
    %39 = arith.mulf %37, %38 : vector<2x6x6xf32>
    %40 = arith.addf %34, %39 : vector<2x6x6xf32>
    %c7 = arith.constant 7 : index
    %41 = memref.load %arg1[%c7] : memref<76xf32, #tpu.memory_space<smem>>
    %c6_27 = arith.constant 6 : index
    %c0_28 = arith.constant 0 : index
    %c0_29 = arith.constant 0 : index
    %c1_30 = arith.constant 1 : index
    %42 = vector.load %arg0[%c6_27, %c0_28, %c0_29, %c1_30] : memref<12x2x8x8xf32, #tpu.memory_space<vmem>>, vector<1x2x6x6xf32>
    %43 = vector.shape_cast %42 : vector<1x2x6x6xf32> to vector<2x6x6xf32>
    %44 = vector.broadcast %41 : f32 to vector<2x6x6xf32>
    %45 = arith.mulf %43, %44 : vector<2x6x6xf32>
    %46 = arith.addf %40, %45 : vector<2x6x6xf32>
    %c8 = arith.constant 8 : index
    %47 = memref.load %arg1[%c8] : memref<76xf32, #tpu.memory_space<smem>>
    %c9_31 = arith.constant 9 : index
    %c0_32 = arith.constant 0 : index
    %c0_33 = arith.constant 0 : index
    %c1_34 = arith.constant 1 : index
    %48 = vector.load %arg0[%c9_31, %c0_32, %c0_33, %c1_34] : memref<12x2x8x8xf32, #tpu.memory_space<vmem>>, vector<1x2x6x6xf32>
    %49 = vector.shape_cast %48 : vector<1x2x6x6xf32> to vector<2x6x6xf32>
    %50 = vector.broadcast %47 : f32 to vector<2x6x6xf32>
    %51 = arith.mulf %49, %50 : vector<2x6x6xf32>
    %52 = arith.addf %46, %51 : vector<2x6x6xf32>
    %c9_35 = arith.constant 9 : index
    %53 = memref.load %arg1[%c9_35] : memref<76xf32, #tpu.memory_space<smem>>
    %c6_36 = arith.constant 6 : index
    %c0_37 = arith.constant 0 : index
    %c0_38 = arith.constant 0 : index
    %c2_39 = arith.constant 2 : index
    %54 = vector.load %arg0[%c6_36, %c0_37, %c0_38, %c2_39] : memref<12x2x8x8xf32, #tpu.memory_space<vmem>>, vector<1x2x6x6xf32>
    %55 = vector.shape_cast %54 : vector<1x2x6x6xf32> to vector<2x6x6xf32>
    %56 = vector.broadcast %53 : f32 to vector<2x6x6xf32>
    %57 = arith.mulf %55, %56 : vector<2x6x6xf32>
    %58 = arith.addf %52, %57 : vector<2x6x6xf32>
    %c10 = arith.constant 10 : index
    %59 = memref.load %arg1[%c10] : memref<76xf32, #tpu.memory_space<smem>>
    %c0_40 = arith.constant 0 : index
    %c0_41 = arith.constant 0 : index
    %c1_42 = arith.constant 1 : index
    %c0_43 = arith.constant 0 : index
    %60 = vector.load %arg0[%c0_40, %c0_41, %c1_42, %c0_43] : memref<12x2x8x8xf32, #tpu.memory_space<vmem>>, vector<1x2x6x6xf32>
    %61 = vector.shape_cast %60 : vector<1x2x6x6xf32> to vector<2x6x6xf32>
    %62 = vector.broadcast %59 : f32 to vector<2x6x6xf32>
    %63 = arith.mulf %61, %62 : vector<2x6x6xf32>
    %64 = arith.addf %58, %63 : vector<2x6x6xf32>
    %c11 = arith.constant 11 : index
    %65 = memref.load %arg1[%c11] : memref<76xf32, #tpu.memory_space<smem>>
    %c3_44 = arith.constant 3 : index
    %c0_45 = arith.constant 0 : index
    %c1_46 = arith.constant 1 : index
    %c0_47 = arith.constant 0 : index
    %66 = vector.load %arg0[%c3_44, %c0_45, %c1_46, %c0_47] : memref<12x2x8x8xf32, #tpu.memory_space<vmem>>, vector<1x2x6x6xf32>
    %67 = vector.shape_cast %66 : vector<1x2x6x6xf32> to vector<2x6x6xf32>
    %68 = vector.broadcast %65 : f32 to vector<2x6x6xf32>
    %69 = arith.mulf %67, %68 : vector<2x6x6xf32>
    %70 = arith.addf %64, %69 : vector<2x6x6xf32>
    %c12 = arith.constant 12 : index
    %71 = memref.load %arg1[%c12] : memref<76xf32, #tpu.memory_space<smem>>
    %c0_48 = arith.constant 0 : index
    %c0_49 = arith.constant 0 : index
    %c1_50 = arith.constant 1 : index
    %c1_51 = arith.constant 1 : index
    %72 = vector.load %arg0[%c0_48, %c0_49, %c1_50, %c1_51] : memref<12x2x8x8xf32, #tpu.memory_space<vmem>>, vector<1x2x6x6xf32>
    %73 = vector.shape_cast %72 : vector<1x2x6x6xf32> to vector<2x6x6xf32>
    %74 = vector.broadcast %71 : f32 to vector<2x6x6xf32>
    %75 = arith.mulf %73, %74 : vector<2x6x6xf32>
    %76 = arith.addf %70, %75 : vector<2x6x6xf32>
    %c13 = arith.constant 13 : index
    %77 = memref.load %arg1[%c13] : memref<76xf32, #tpu.memory_space<smem>>
    %c3_52 = arith.constant 3 : index
    %c0_53 = arith.constant 0 : index
    %c1_54 = arith.constant 1 : index
    %c1_55 = arith.constant 1 : index
    %78 = vector.load %arg0[%c3_52, %c0_53, %c1_54, %c1_55] : memref<12x2x8x8xf32, #tpu.memory_space<vmem>>, vector<1x2x6x6xf32>
    %79 = vector.shape_cast %78 : vector<1x2x6x6xf32> to vector<2x6x6xf32>
    %80 = vector.broadcast %77 : f32 to vector<2x6x6xf32>
    %81 = arith.mulf %79, %80 : vector<2x6x6xf32>
    %82 = arith.addf %76, %81 : vector<2x6x6xf32>
    %c14 = arith.constant 14 : index
    %83 = memref.load %arg1[%c14] : memref<76xf32, #tpu.memory_space<smem>>
    %c0_56 = arith.constant 0 : index
    %c0_57 = arith.constant 0 : index
    %c1_58 = arith.constant 1 : index
    %c2_59 = arith.constant 2 : index
    %84 = vector.load %arg0[%c0_56, %c0_57, %c1_58, %c2_59] : memref<12x2x8x8xf32, #tpu.memory_space<vmem>>, vector<1x2x6x6xf32>
    %85 = vector.shape_cast %84 : vector<1x2x6x6xf32> to vector<2x6x6xf32>
    %86 = vector.broadcast %83 : f32 to vector<2x6x6xf32>
    %87 = arith.mulf %85, %86 : vector<2x6x6xf32>
    %88 = arith.addf %82, %87 : vector<2x6x6xf32>
    %c15 = arith.constant 15 : index
    %89 = memref.load %arg1[%c15] : memref<76xf32, #tpu.memory_space<smem>>
    %c6_60 = arith.constant 6 : index
    %c0_61 = arith.constant 0 : index
    %c1_62 = arith.constant 1 : index
    %c0_63 = arith.constant 0 : index
    %90 = vector.load %arg0[%c6_60, %c0_61, %c1_62, %c0_63] : memref<12x2x8x8xf32, #tpu.memory_space<vmem>>, vector<1x2x6x6xf32>
    %91 = vector.shape_cast %90 : vector<1x2x6x6xf32> to vector<2x6x6xf32>
    %92 = vector.broadcast %89 : f32 to vector<2x6x6xf32>
    %93 = arith.mulf %91, %92 : vector<2x6x6xf32>
    %94 = arith.addf %88, %93 : vector<2x6x6xf32>
    %c16 = arith.constant 16 : index
    %95 = memref.load %arg1[%c16] : memref<76xf32, #tpu.memory_space<smem>>
    %c9_64 = arith.constant 9 : index
    %c0_65 = arith.constant 0 : index
    %c1_66 = arith.constant 1 : index
    %c0_67 = arith.constant 0 : index
    %96 = vector.load %arg0[%c9_64, %c0_65, %c1_66, %c0_67] : memref<12x2x8x8xf32, #tpu.memory_space<vmem>>, vector<1x2x6x6xf32>
    %97 = vector.shape_cast %96 : vector<1x2x6x6xf32> to vector<2x6x6xf32>
    %98 = vector.broadcast %95 : f32 to vector<2x6x6xf32>
    %99 = arith.mulf %97, %98 : vector<2x6x6xf32>
    %100 = arith.addf %94, %99 : vector<2x6x6xf32>
    %c17 = arith.constant 17 : index
    %101 = memref.load %arg1[%c17] : memref<76xf32, #tpu.memory_space<smem>>
    %c6_68 = arith.constant 6 : index
    %c0_69 = arith.constant 0 : index
    %c1_70 = arith.constant 1 : index
    %c1_71 = arith.constant 1 : index
    %102 = vector.load %arg0[%c6_68, %c0_69, %c1_70, %c1_71] : memref<12x2x8x8xf32, #tpu.memory_space<vmem>>, vector<1x2x6x6xf32>
    %103 = vector.shape_cast %102 : vector<1x2x6x6xf32> to vector<2x6x6xf32>
    %104 = vector.broadcast %101 : f32 to vector<2x6x6xf32>
    %105 = arith.mulf %103, %104 : vector<2x6x6xf32>
    %106 = arith.addf %100, %105 : vector<2x6x6xf32>
    %c18 = arith.constant 18 : index
    %107 = memref.load %arg1[%c18] : memref<76xf32, #tpu.memory_space<smem>>
    %c9_72 = arith.constant 9 : index
    %c0_73 = arith.constant 0 : index
    %c1_74 = arith.constant 1 : index
    %c1_75 = arith.constant 1 : index
    %108 = vector.load %arg0[%c9_72, %c0_73, %c1_74, %c1_75] : memref<12x2x8x8xf32, #tpu.memory_space<vmem>>, vector<1x2x6x6xf32>
    %109 = vector.shape_cast %108 : vector<1x2x6x6xf32> to vector<2x6x6xf32>
    %110 = vector.broadcast %107 : f32 to vector<2x6x6xf32>
    %111 = arith.mulf %109, %110 : vector<2x6x6xf32>
    %112 = arith.addf %106, %111 : vector<2x6x6xf32>
    %c19 = arith.constant 19 : index
    %113 = memref.load %arg1[%c19] : memref<76xf32, #tpu.memory_space<smem>>
    %c6_76 = arith.constant 6 : index
    %c0_77 = arith.constant 0 : index
    %c1_78 = arith.constant 1 : index
    %c2_79 = arith.constant 2 : index
    %114 = vector.load %arg0[%c6_76, %c0_77, %c1_78, %c2_79] : memref<12x2x8x8xf32, #tpu.memory_space<vmem>>, vector<1x2x6x6xf32>
    %115 = vector.shape_cast %114 : vector<1x2x6x6xf32> to vector<2x6x6xf32>
    %116 = vector.broadcast %113 : f32 to vector<2x6x6xf32>
    %117 = arith.mulf %115, %116 : vector<2x6x6xf32>
    %118 = arith.addf %112, %117 : vector<2x6x6xf32>
    %c20 = arith.constant 20 : index
    %119 = memref.load %arg1[%c20] : memref<76xf32, #tpu.memory_space<smem>>
    %c0_80 = arith.constant 0 : index
    %c0_81 = arith.constant 0 : index
    %c2_82 = arith.constant 2 : index
    %c0_83 = arith.constant 0 : index
    %120 = vector.load %arg0[%c0_80, %c0_81, %c2_82, %c0_83] : memref<12x2x8x8xf32, #tpu.memory_space<vmem>>, vector<1x2x6x6xf32>
    %121 = vector.shape_cast %120 : vector<1x2x6x6xf32> to vector<2x6x6xf32>
    %122 = vector.broadcast %119 : f32 to vector<2x6x6xf32>
    %123 = arith.mulf %121, %122 : vector<2x6x6xf32>
    %124 = arith.addf %118, %123 : vector<2x6x6xf32>
    %c21 = arith.constant 21 : index
    %125 = memref.load %arg1[%c21] : memref<76xf32, #tpu.memory_space<smem>>
    %c3_84 = arith.constant 3 : index
    %c0_85 = arith.constant 0 : index
    %c2_86 = arith.constant 2 : index
    %c0_87 = arith.constant 0 : index
    %126 = vector.load %arg0[%c3_84, %c0_85, %c2_86, %c0_87] : memref<12x2x8x8xf32, #tpu.memory_space<vmem>>, vector<1x2x6x6xf32>
    %127 = vector.shape_cast %126 : vector<1x2x6x6xf32> to vector<2x6x6xf32>
    %128 = vector.broadcast %125 : f32 to vector<2x6x6xf32>
    %129 = arith.mulf %127, %128 : vector<2x6x6xf32>
    %130 = arith.addf %124, %129 : vector<2x6x6xf32>
    %c22 = arith.constant 22 : index
    %131 = memref.load %arg1[%c22] : memref<76xf32, #tpu.memory_space<smem>>
    %c0_88 = arith.constant 0 : index
    %c0_89 = arith.constant 0 : index
    %c2_90 = arith.constant 2 : index
    %c1_91 = arith.constant 1 : index
    %132 = vector.load %arg0[%c0_88, %c0_89, %c2_90, %c1_91] : memref<12x2x8x8xf32, #tpu.memory_space<vmem>>, vector<1x2x6x6xf32>
    %133 = vector.shape_cast %132 : vector<1x2x6x6xf32> to vector<2x6x6xf32>
    %134 = vector.broadcast %131 : f32 to vector<2x6x6xf32>
    %135 = arith.mulf %133, %134 : vector<2x6x6xf32>
    %136 = arith.addf %130, %135 : vector<2x6x6xf32>
    %c23 = arith.constant 23 : index
    %137 = memref.load %arg1[%c23] : memref<76xf32, #tpu.memory_space<smem>>
    %c3_92 = arith.constant 3 : index
    %c0_93 = arith.constant 0 : index
    %c2_94 = arith.constant 2 : index
    %c1_95 = arith.constant 1 : index
    %138 = vector.load %arg0[%c3_92, %c0_93, %c2_94, %c1_95] : memref<12x2x8x8xf32, #tpu.memory_space<vmem>>, vector<1x2x6x6xf32>
    %139 = vector.shape_cast %138 : vector<1x2x6x6xf32> to vector<2x6x6xf32>
    %140 = vector.broadcast %137 : f32 to vector<2x6x6xf32>
    %141 = arith.mulf %139, %140 : vector<2x6x6xf32>
    %142 = arith.addf %136, %141 : vector<2x6x6xf32>
    %c24 = arith.constant 24 : index
    %143 = memref.load %arg1[%c24] : memref<76xf32, #tpu.memory_space<smem>>
    %c0_96 = arith.constant 0 : index
    %c0_97 = arith.constant 0 : index
    %c2_98 = arith.constant 2 : index
    %c2_99 = arith.constant 2 : index
    %144 = vector.load %arg0[%c0_96, %c0_97, %c2_98, %c2_99] : memref<12x2x8x8xf32, #tpu.memory_space<vmem>>, vector<1x2x6x6xf32>
    %145 = vector.shape_cast %144 : vector<1x2x6x6xf32> to vector<2x6x6xf32>
    %146 = vector.broadcast %143 : f32 to vector<2x6x6xf32>
    %147 = arith.mulf %145, %146 : vector<2x6x6xf32>
    %148 = arith.addf %142, %147 : vector<2x6x6xf32>
    %c25 = arith.constant 25 : index
    %149 = memref.load %arg1[%c25] : memref<76xf32, #tpu.memory_space<smem>>
    %c1_100 = arith.constant 1 : index
    %c0_101 = arith.constant 0 : index
    %c0_102 = arith.constant 0 : index
    %c0_103 = arith.constant 0 : index
    %150 = vector.load %arg0[%c1_100, %c0_101, %c0_102, %c0_103] : memref<12x2x8x8xf32, #tpu.memory_space<vmem>>, vector<1x2x6x6xf32>
    %151 = vector.shape_cast %150 : vector<1x2x6x6xf32> to vector<2x6x6xf32>
    %152 = vector.broadcast %149 : f32 to vector<2x6x6xf32>
    %153 = arith.mulf %151, %152 : vector<2x6x6xf32>
    %154 = arith.addf %148, %153 : vector<2x6x6xf32>
    %c26 = arith.constant 26 : index
    %155 = memref.load %arg1[%c26] : memref<76xf32, #tpu.memory_space<smem>>
    %c4_104 = arith.constant 4 : index
    %c0_105 = arith.constant 0 : index
    %c0_106 = arith.constant 0 : index
    %c0_107 = arith.constant 0 : index
    %156 = vector.load %arg0[%c4_104, %c0_105, %c0_106, %c0_107] : memref<12x2x8x8xf32, #tpu.memory_space<vmem>>, vector<1x2x6x6xf32>
    %157 = vector.shape_cast %156 : vector<1x2x6x6xf32> to vector<2x6x6xf32>
    %158 = vector.broadcast %155 : f32 to vector<2x6x6xf32>
    %159 = arith.mulf %157, %158 : vector<2x6x6xf32>
    %160 = arith.addf %154, %159 : vector<2x6x6xf32>
    %c27 = arith.constant 27 : index
    %161 = memref.load %arg1[%c27] : memref<76xf32, #tpu.memory_space<smem>>
    %c1_108 = arith.constant 1 : index
    %c0_109 = arith.constant 0 : index
    %c0_110 = arith.constant 0 : index
    %c1_111 = arith.constant 1 : index
    %162 = vector.load %arg0[%c1_108, %c0_109, %c0_110, %c1_111] : memref<12x2x8x8xf32, #tpu.memory_space<vmem>>, vector<1x2x6x6xf32>
    %163 = vector.shape_cast %162 : vector<1x2x6x6xf32> to vector<2x6x6xf32>
    %164 = vector.broadcast %161 : f32 to vector<2x6x6xf32>
    %165 = arith.mulf %163, %164 : vector<2x6x6xf32>
    %166 = arith.addf %160, %165 : vector<2x6x6xf32>
    %c28 = arith.constant 28 : index
    %167 = memref.load %arg1[%c28] : memref<76xf32, #tpu.memory_space<smem>>
    %c4_112 = arith.constant 4 : index
    %c0_113 = arith.constant 0 : index
    %c0_114 = arith.constant 0 : index
    %c1_115 = arith.constant 1 : index
    %168 = vector.load %arg0[%c4_112, %c0_113, %c0_114, %c1_115] : memref<12x2x8x8xf32, #tpu.memory_space<vmem>>, vector<1x2x6x6xf32>
    %169 = vector.shape_cast %168 : vector<1x2x6x6xf32> to vector<2x6x6xf32>
    %170 = vector.broadcast %167 : f32 to vector<2x6x6xf32>
    %171 = arith.mulf %169, %170 : vector<2x6x6xf32>
    %172 = arith.addf %166, %171 : vector<2x6x6xf32>
    %c29 = arith.constant 29 : index
    %173 = memref.load %arg1[%c29] : memref<76xf32, #tpu.memory_space<smem>>
    %c1_116 = arith.constant 1 : index
    %c0_117 = arith.constant 0 : index
    %c0_118 = arith.constant 0 : index
    %c2_119 = arith.constant 2 : index
    %174 = vector.load %arg0[%c1_116, %c0_117, %c0_118, %c2_119] : memref<12x2x8x8xf32, #tpu.memory_space<vmem>>, vector<1x2x6x6xf32>
    %175 = vector.shape_cast %174 : vector<1x2x6x6xf32> to vector<2x6x6xf32>
    %176 = vector.broadcast %173 : f32 to vector<2x6x6xf32>
    %177 = arith.mulf %175, %176 : vector<2x6x6xf32>
    %178 = arith.addf %172, %177 : vector<2x6x6xf32>
    %c30 = arith.constant 30 : index
    %179 = memref.load %arg1[%c30] : memref<76xf32, #tpu.memory_space<smem>>
    %c7_120 = arith.constant 7 : index
    %c0_121 = arith.constant 0 : index
    %c0_122 = arith.constant 0 : index
    %c0_123 = arith.constant 0 : index
    %180 = vector.load %arg0[%c7_120, %c0_121, %c0_122, %c0_123] : memref<12x2x8x8xf32, #tpu.memory_space<vmem>>, vector<1x2x6x6xf32>
    %181 = vector.shape_cast %180 : vector<1x2x6x6xf32> to vector<2x6x6xf32>
    %182 = vector.broadcast %179 : f32 to vector<2x6x6xf32>
    %183 = arith.mulf %181, %182 : vector<2x6x6xf32>
    %184 = arith.addf %178, %183 : vector<2x6x6xf32>
    %c31 = arith.constant 31 : index
    %185 = memref.load %arg1[%c31] : memref<76xf32, #tpu.memory_space<smem>>
    %c10_124 = arith.constant 10 : index
    %c0_125 = arith.constant 0 : index
    %c0_126 = arith.constant 0 : index
    %c0_127 = arith.constant 0 : index
    %186 = vector.load %arg0[%c10_124, %c0_125, %c0_126, %c0_127] : memref<12x2x8x8xf32, #tpu.memory_space<vmem>>, vector<1x2x6x6xf32>
    %187 = vector.shape_cast %186 : vector<1x2x6x6xf32> to vector<2x6x6xf32>
    %188 = vector.broadcast %185 : f32 to vector<2x6x6xf32>
    %189 = arith.mulf %187, %188 : vector<2x6x6xf32>
    %190 = arith.addf %184, %189 : vector<2x6x6xf32>
    %c32 = arith.constant 32 : index
    %191 = memref.load %arg1[%c32] : memref<76xf32, #tpu.memory_space<smem>>
    %c7_128 = arith.constant 7 : index
    %c0_129 = arith.constant 0 : index
    %c0_130 = arith.constant 0 : index
    %c1_131 = arith.constant 1 : index
    %192 = vector.load %arg0[%c7_128, %c0_129, %c0_130, %c1_131] : memref<12x2x8x8xf32, #tpu.memory_space<vmem>>, vector<1x2x6x6xf32>
    %193 = vector.shape_cast %192 : vector<1x2x6x6xf32> to vector<2x6x6xf32>
    %194 = vector.broadcast %191 : f32 to vector<2x6x6xf32>
    %195 = arith.mulf %193, %194 : vector<2x6x6xf32>
    %196 = arith.addf %190, %195 : vector<2x6x6xf32>
    %c33 = arith.constant 33 : index
    %197 = memref.load %arg1[%c33] : memref<76xf32, #tpu.memory_space<smem>>
    %c10_132 = arith.constant 10 : index
    %c0_133 = arith.constant 0 : index
    %c0_134 = arith.constant 0 : index
    %c1_135 = arith.constant 1 : index
    %198 = vector.load %arg0[%c10_132, %c0_133, %c0_134, %c1_135] : memref<12x2x8x8xf32, #tpu.memory_space<vmem>>, vector<1x2x6x6xf32>
    %199 = vector.shape_cast %198 : vector<1x2x6x6xf32> to vector<2x6x6xf32>
    %200 = vector.broadcast %197 : f32 to vector<2x6x6xf32>
    %201 = arith.mulf %199, %200 : vector<2x6x6xf32>
    %202 = arith.addf %196, %201 : vector<2x6x6xf32>
    %c34 = arith.constant 34 : index
    %203 = memref.load %arg1[%c34] : memref<76xf32, #tpu.memory_space<smem>>
    %c7_136 = arith.constant 7 : index
    %c0_137 = arith.constant 0 : index
    %c0_138 = arith.constant 0 : index
    %c2_139 = arith.constant 2 : index
    %204 = vector.load %arg0[%c7_136, %c0_137, %c0_138, %c2_139] : memref<12x2x8x8xf32, #tpu.memory_space<vmem>>, vector<1x2x6x6xf32>
    %205 = vector.shape_cast %204 : vector<1x2x6x6xf32> to vector<2x6x6xf32>
    %206 = vector.broadcast %203 : f32 to vector<2x6x6xf32>
    %207 = arith.mulf %205, %206 : vector<2x6x6xf32>
    %208 = arith.addf %202, %207 : vector<2x6x6xf32>
    %c35 = arith.constant 35 : index
    %209 = memref.load %arg1[%c35] : memref<76xf32, #tpu.memory_space<smem>>
    %c1_140 = arith.constant 1 : index
    %c0_141 = arith.constant 0 : index
    %c1_142 = arith.constant 1 : index
    %c0_143 = arith.constant 0 : index
    %210 = vector.load %arg0[%c1_140, %c0_141, %c1_142, %c0_143] : memref<12x2x8x8xf32, #tpu.memory_space<vmem>>, vector<1x2x6x6xf32>
    %211 = vector.shape_cast %210 : vector<1x2x6x6xf32> to vector<2x6x6xf32>
    %212 = vector.broadcast %209 : f32 to vector<2x6x6xf32>
    %213 = arith.mulf %211, %212 : vector<2x6x6xf32>
    %214 = arith.addf %208, %213 : vector<2x6x6xf32>
    %c36 = arith.constant 36 : index
    %215 = memref.load %arg1[%c36] : memref<76xf32, #tpu.memory_space<smem>>
    %c4_144 = arith.constant 4 : index
    %c0_145 = arith.constant 0 : index
    %c1_146 = arith.constant 1 : index
    %c0_147 = arith.constant 0 : index
    %216 = vector.load %arg0[%c4_144, %c0_145, %c1_146, %c0_147] : memref<12x2x8x8xf32, #tpu.memory_space<vmem>>, vector<1x2x6x6xf32>
    %217 = vector.shape_cast %216 : vector<1x2x6x6xf32> to vector<2x6x6xf32>
    %218 = vector.broadcast %215 : f32 to vector<2x6x6xf32>
    %219 = arith.mulf %217, %218 : vector<2x6x6xf32>
    %220 = arith.addf %214, %219 : vector<2x6x6xf32>
    %c37 = arith.constant 37 : index
    %221 = memref.load %arg1[%c37] : memref<76xf32, #tpu.memory_space<smem>>
    %c1_148 = arith.constant 1 : index
    %c0_149 = arith.constant 0 : index
    %c1_150 = arith.constant 1 : index
    %c1_151 = arith.constant 1 : index
    %222 = vector.load %arg0[%c1_148, %c0_149, %c1_150, %c1_151] : memref<12x2x8x8xf32, #tpu.memory_space<vmem>>, vector<1x2x6x6xf32>
    %223 = vector.shape_cast %222 : vector<1x2x6x6xf32> to vector<2x6x6xf32>
    %224 = vector.broadcast %221 : f32 to vector<2x6x6xf32>
    %225 = arith.mulf %223, %224 : vector<2x6x6xf32>
    %226 = arith.addf %220, %225 : vector<2x6x6xf32>
    %c38 = arith.constant 38 : index
    %227 = memref.load %arg1[%c38] : memref<76xf32, #tpu.memory_space<smem>>
    %c4_152 = arith.constant 4 : index
    %c0_153 = arith.constant 0 : index
    %c1_154 = arith.constant 1 : index
    %c1_155 = arith.constant 1 : index
    %228 = vector.load %arg0[%c4_152, %c0_153, %c1_154, %c1_155] : memref<12x2x8x8xf32, #tpu.memory_space<vmem>>, vector<1x2x6x6xf32>
    %229 = vector.shape_cast %228 : vector<1x2x6x6xf32> to vector<2x6x6xf32>
    %230 = vector.broadcast %227 : f32 to vector<2x6x6xf32>
    %231 = arith.mulf %229, %230 : vector<2x6x6xf32>
    %232 = arith.addf %226, %231 : vector<2x6x6xf32>
    %c39 = arith.constant 39 : index
    %233 = memref.load %arg1[%c39] : memref<76xf32, #tpu.memory_space<smem>>
    %c1_156 = arith.constant 1 : index
    %c0_157 = arith.constant 0 : index
    %c1_158 = arith.constant 1 : index
    %c2_159 = arith.constant 2 : index
    %234 = vector.load %arg0[%c1_156, %c0_157, %c1_158, %c2_159] : memref<12x2x8x8xf32, #tpu.memory_space<vmem>>, vector<1x2x6x6xf32>
    %235 = vector.shape_cast %234 : vector<1x2x6x6xf32> to vector<2x6x6xf32>
    %236 = vector.broadcast %233 : f32 to vector<2x6x6xf32>
    %237 = arith.mulf %235, %236 : vector<2x6x6xf32>
    %238 = arith.addf %232, %237 : vector<2x6x6xf32>
    %c40 = arith.constant 40 : index
    %239 = memref.load %arg1[%c40] : memref<76xf32, #tpu.memory_space<smem>>
    %c7_160 = arith.constant 7 : index
    %c0_161 = arith.constant 0 : index
    %c1_162 = arith.constant 1 : index
    %c0_163 = arith.constant 0 : index
    %240 = vector.load %arg0[%c7_160, %c0_161, %c1_162, %c0_163] : memref<12x2x8x8xf32, #tpu.memory_space<vmem>>, vector<1x2x6x6xf32>
    %241 = vector.shape_cast %240 : vector<1x2x6x6xf32> to vector<2x6x6xf32>
    %242 = vector.broadcast %239 : f32 to vector<2x6x6xf32>
    %243 = arith.mulf %241, %242 : vector<2x6x6xf32>
    %244 = arith.addf %238, %243 : vector<2x6x6xf32>
    %c41 = arith.constant 41 : index
    %245 = memref.load %arg1[%c41] : memref<76xf32, #tpu.memory_space<smem>>
    %c10_164 = arith.constant 10 : index
    %c0_165 = arith.constant 0 : index
    %c1_166 = arith.constant 1 : index
    %c0_167 = arith.constant 0 : index
    %246 = vector.load %arg0[%c10_164, %c0_165, %c1_166, %c0_167] : memref<12x2x8x8xf32, #tpu.memory_space<vmem>>, vector<1x2x6x6xf32>
    %247 = vector.shape_cast %246 : vector<1x2x6x6xf32> to vector<2x6x6xf32>
    %248 = vector.broadcast %245 : f32 to vector<2x6x6xf32>
    %249 = arith.mulf %247, %248 : vector<2x6x6xf32>
    %250 = arith.addf %244, %249 : vector<2x6x6xf32>
    %c42 = arith.constant 42 : index
    %251 = memref.load %arg1[%c42] : memref<76xf32, #tpu.memory_space<smem>>
    %c7_168 = arith.constant 7 : index
    %c0_169 = arith.constant 0 : index
    %c1_170 = arith.constant 1 : index
    %c1_171 = arith.constant 1 : index
    %252 = vector.load %arg0[%c7_168, %c0_169, %c1_170, %c1_171] : memref<12x2x8x8xf32, #tpu.memory_space<vmem>>, vector<1x2x6x6xf32>
    %253 = vector.shape_cast %252 : vector<1x2x6x6xf32> to vector<2x6x6xf32>
    %254 = vector.broadcast %251 : f32 to vector<2x6x6xf32>
    %255 = arith.mulf %253, %254 : vector<2x6x6xf32>
    %256 = arith.addf %250, %255 : vector<2x6x6xf32>
    %c43 = arith.constant 43 : index
    %257 = memref.load %arg1[%c43] : memref<76xf32, #tpu.memory_space<smem>>
    %c10_172 = arith.constant 10 : index
    %c0_173 = arith.constant 0 : index
    %c1_174 = arith.constant 1 : index
    %c1_175 = arith.constant 1 : index
    %258 = vector.load %arg0[%c10_172, %c0_173, %c1_174, %c1_175] : memref<12x2x8x8xf32, #tpu.memory_space<vmem>>, vector<1x2x6x6xf32>
    %259 = vector.shape_cast %258 : vector<1x2x6x6xf32> to vector<2x6x6xf32>
    %260 = vector.broadcast %257 : f32 to vector<2x6x6xf32>
    %261 = arith.mulf %259, %260 : vector<2x6x6xf32>
    %262 = arith.addf %256, %261 : vector<2x6x6xf32>
    %c44 = arith.constant 44 : index
    %263 = memref.load %arg1[%c44] : memref<76xf32, #tpu.memory_space<smem>>
    %c7_176 = arith.constant 7 : index
    %c0_177 = arith.constant 0 : index
    %c1_178 = arith.constant 1 : index
    %c2_179 = arith.constant 2 : index
    %264 = vector.load %arg0[%c7_176, %c0_177, %c1_178, %c2_179] : memref<12x2x8x8xf32, #tpu.memory_space<vmem>>, vector<1x2x6x6xf32>
    %265 = vector.shape_cast %264 : vector<1x2x6x6xf32> to vector<2x6x6xf32>
    %266 = vector.broadcast %263 : f32 to vector<2x6x6xf32>
    %267 = arith.mulf %265, %266 : vector<2x6x6xf32>
    %268 = arith.addf %262, %267 : vector<2x6x6xf32>
    %c45 = arith.constant 45 : index
    %269 = memref.load %arg1[%c45] : memref<76xf32, #tpu.memory_space<smem>>
    %c1_180 = arith.constant 1 : index
    %c0_181 = arith.constant 0 : index
    %c2_182 = arith.constant 2 : index
    %c0_183 = arith.constant 0 : index
    %270 = vector.load %arg0[%c1_180, %c0_181, %c2_182, %c0_183] : memref<12x2x8x8xf32, #tpu.memory_space<vmem>>, vector<1x2x6x6xf32>
    %271 = vector.shape_cast %270 : vector<1x2x6x6xf32> to vector<2x6x6xf32>
    %272 = vector.broadcast %269 : f32 to vector<2x6x6xf32>
    %273 = arith.mulf %271, %272 : vector<2x6x6xf32>
    %274 = arith.addf %268, %273 : vector<2x6x6xf32>
    %c46 = arith.constant 46 : index
    %275 = memref.load %arg1[%c46] : memref<76xf32, #tpu.memory_space<smem>>
    %c4_184 = arith.constant 4 : index
    %c0_185 = arith.constant 0 : index
    %c2_186 = arith.constant 2 : index
    %c0_187 = arith.constant 0 : index
    %276 = vector.load %arg0[%c4_184, %c0_185, %c2_186, %c0_187] : memref<12x2x8x8xf32, #tpu.memory_space<vmem>>, vector<1x2x6x6xf32>
    %277 = vector.shape_cast %276 : vector<1x2x6x6xf32> to vector<2x6x6xf32>
    %278 = vector.broadcast %275 : f32 to vector<2x6x6xf32>
    %279 = arith.mulf %277, %278 : vector<2x6x6xf32>
    %280 = arith.addf %274, %279 : vector<2x6x6xf32>
    %c47 = arith.constant 47 : index
    %281 = memref.load %arg1[%c47] : memref<76xf32, #tpu.memory_space<smem>>
    %c1_188 = arith.constant 1 : index
    %c0_189 = arith.constant 0 : index
    %c2_190 = arith.constant 2 : index
    %c1_191 = arith.constant 1 : index
    %282 = vector.load %arg0[%c1_188, %c0_189, %c2_190, %c1_191] : memref<12x2x8x8xf32, #tpu.memory_space<vmem>>, vector<1x2x6x6xf32>
    %283 = vector.shape_cast %282 : vector<1x2x6x6xf32> to vector<2x6x6xf32>
    %284 = vector.broadcast %281 : f32 to vector<2x6x6xf32>
    %285 = arith.mulf %283, %284 : vector<2x6x6xf32>
    %286 = arith.addf %280, %285 : vector<2x6x6xf32>
    %c48 = arith.constant 48 : index
    %287 = memref.load %arg1[%c48] : memref<76xf32, #tpu.memory_space<smem>>
    %c4_192 = arith.constant 4 : index
    %c0_193 = arith.constant 0 : index
    %c2_194 = arith.constant 2 : index
    %c1_195 = arith.constant 1 : index
    %288 = vector.load %arg0[%c4_192, %c0_193, %c2_194, %c1_195] : memref<12x2x8x8xf32, #tpu.memory_space<vmem>>, vector<1x2x6x6xf32>
    %289 = vector.shape_cast %288 : vector<1x2x6x6xf32> to vector<2x6x6xf32>
    %290 = vector.broadcast %287 : f32 to vector<2x6x6xf32>
    %291 = arith.mulf %289, %290 : vector<2x6x6xf32>
    %292 = arith.addf %286, %291 : vector<2x6x6xf32>
    %c49 = arith.constant 49 : index
    %293 = memref.load %arg1[%c49] : memref<76xf32, #tpu.memory_space<smem>>
    %c1_196 = arith.constant 1 : index
    %c0_197 = arith.constant 0 : index
    %c2_198 = arith.constant 2 : index
    %c2_199 = arith.constant 2 : index
    %294 = vector.load %arg0[%c1_196, %c0_197, %c2_198, %c2_199] : memref<12x2x8x8xf32, #tpu.memory_space<vmem>>, vector<1x2x6x6xf32>
    %295 = vector.shape_cast %294 : vector<1x2x6x6xf32> to vector<2x6x6xf32>
    %296 = vector.broadcast %293 : f32 to vector<2x6x6xf32>
    %297 = arith.mulf %295, %296 : vector<2x6x6xf32>
    %298 = arith.addf %292, %297 : vector<2x6x6xf32>
    %c50 = arith.constant 50 : index
    %299 = memref.load %arg1[%c50] : memref<76xf32, #tpu.memory_space<smem>>
    %c2_200 = arith.constant 2 : index
    %c0_201 = arith.constant 0 : index
    %c0_202 = arith.constant 0 : index
    %c0_203 = arith.constant 0 : index
    %300 = vector.load %arg0[%c2_200, %c0_201, %c0_202, %c0_203] : memref<12x2x8x8xf32, #tpu.memory_space<vmem>>, vector<1x2x6x6xf32>
    %301 = vector.shape_cast %300 : vector<1x2x6x6xf32> to vector<2x6x6xf32>
    %302 = vector.broadcast %299 : f32 to vector<2x6x6xf32>
    %303 = arith.mulf %301, %302 : vector<2x6x6xf32>
    %304 = arith.addf %298, %303 : vector<2x6x6xf32>
    %c51 = arith.constant 51 : index
    %305 = memref.load %arg1[%c51] : memref<76xf32, #tpu.memory_space<smem>>
    %c5_204 = arith.constant 5 : index
    %c0_205 = arith.constant 0 : index
    %c0_206 = arith.constant 0 : index
    %c0_207 = arith.constant 0 : index
    %306 = vector.load %arg0[%c5_204, %c0_205, %c0_206, %c0_207] : memref<12x2x8x8xf32, #tpu.memory_space<vmem>>, vector<1x2x6x6xf32>
    %307 = vector.shape_cast %306 : vector<1x2x6x6xf32> to vector<2x6x6xf32>
    %308 = vector.broadcast %305 : f32 to vector<2x6x6xf32>
    %309 = arith.mulf %307, %308 : vector<2x6x6xf32>
    %310 = arith.addf %304, %309 : vector<2x6x6xf32>
    %c52 = arith.constant 52 : index
    %311 = memref.load %arg1[%c52] : memref<76xf32, #tpu.memory_space<smem>>
    %c2_208 = arith.constant 2 : index
    %c0_209 = arith.constant 0 : index
    %c0_210 = arith.constant 0 : index
    %c1_211 = arith.constant 1 : index
    %312 = vector.load %arg0[%c2_208, %c0_209, %c0_210, %c1_211] : memref<12x2x8x8xf32, #tpu.memory_space<vmem>>, vector<1x2x6x6xf32>
    %313 = vector.shape_cast %312 : vector<1x2x6x6xf32> to vector<2x6x6xf32>
    %314 = vector.broadcast %311 : f32 to vector<2x6x6xf32>
    %315 = arith.mulf %313, %314 : vector<2x6x6xf32>
    %316 = arith.addf %310, %315 : vector<2x6x6xf32>
    %c53 = arith.constant 53 : index
    %317 = memref.load %arg1[%c53] : memref<76xf32, #tpu.memory_space<smem>>
    %c5_212 = arith.constant 5 : index
    %c0_213 = arith.constant 0 : index
    %c0_214 = arith.constant 0 : index
    %c1_215 = arith.constant 1 : index
    %318 = vector.load %arg0[%c5_212, %c0_213, %c0_214, %c1_215] : memref<12x2x8x8xf32, #tpu.memory_space<vmem>>, vector<1x2x6x6xf32>
    %319 = vector.shape_cast %318 : vector<1x2x6x6xf32> to vector<2x6x6xf32>
    %320 = vector.broadcast %317 : f32 to vector<2x6x6xf32>
    %321 = arith.mulf %319, %320 : vector<2x6x6xf32>
    %322 = arith.addf %316, %321 : vector<2x6x6xf32>
    %c54 = arith.constant 54 : index
    %323 = memref.load %arg1[%c54] : memref<76xf32, #tpu.memory_space<smem>>
    %c2_216 = arith.constant 2 : index
    %c0_217 = arith.constant 0 : index
    %c0_218 = arith.constant 0 : index
    %c2_219 = arith.constant 2 : index
    %324 = vector.load %arg0[%c2_216, %c0_217, %c0_218, %c2_219] : memref<12x2x8x8xf32, #tpu.memory_space<vmem>>, vector<1x2x6x6xf32>
    %325 = vector.shape_cast %324 : vector<1x2x6x6xf32> to vector<2x6x6xf32>
    %326 = vector.broadcast %323 : f32 to vector<2x6x6xf32>
    %327 = arith.mulf %325, %326 : vector<2x6x6xf32>
    %328 = arith.addf %322, %327 : vector<2x6x6xf32>
    %c55 = arith.constant 55 : index
    %329 = memref.load %arg1[%c55] : memref<76xf32, #tpu.memory_space<smem>>
    %c8_220 = arith.constant 8 : index
    %c0_221 = arith.constant 0 : index
    %c0_222 = arith.constant 0 : index
    %c0_223 = arith.constant 0 : index
    %330 = vector.load %arg0[%c8_220, %c0_221, %c0_222, %c0_223] : memref<12x2x8x8xf32, #tpu.memory_space<vmem>>, vector<1x2x6x6xf32>
    %331 = vector.shape_cast %330 : vector<1x2x6x6xf32> to vector<2x6x6xf32>
    %332 = vector.broadcast %329 : f32 to vector<2x6x6xf32>
    %333 = arith.mulf %331, %332 : vector<2x6x6xf32>
    %334 = arith.addf %328, %333 : vector<2x6x6xf32>
    %c56 = arith.constant 56 : index
    %335 = memref.load %arg1[%c56] : memref<76xf32, #tpu.memory_space<smem>>
    %c11_224 = arith.constant 11 : index
    %c0_225 = arith.constant 0 : index
    %c0_226 = arith.constant 0 : index
    %c0_227 = arith.constant 0 : index
    %336 = vector.load %arg0[%c11_224, %c0_225, %c0_226, %c0_227] : memref<12x2x8x8xf32, #tpu.memory_space<vmem>>, vector<1x2x6x6xf32>
    %337 = vector.shape_cast %336 : vector<1x2x6x6xf32> to vector<2x6x6xf32>
    %338 = vector.broadcast %335 : f32 to vector<2x6x6xf32>
    %339 = arith.mulf %337, %338 : vector<2x6x6xf32>
    %340 = arith.addf %334, %339 : vector<2x6x6xf32>
    %c57 = arith.constant 57 : index
    %341 = memref.load %arg1[%c57] : memref<76xf32, #tpu.memory_space<smem>>
    %c8_228 = arith.constant 8 : index
    %c0_229 = arith.constant 0 : index
    %c0_230 = arith.constant 0 : index
    %c1_231 = arith.constant 1 : index
    %342 = vector.load %arg0[%c8_228, %c0_229, %c0_230, %c1_231] : memref<12x2x8x8xf32, #tpu.memory_space<vmem>>, vector<1x2x6x6xf32>
    %343 = vector.shape_cast %342 : vector<1x2x6x6xf32> to vector<2x6x6xf32>
    %344 = vector.broadcast %341 : f32 to vector<2x6x6xf32>
    %345 = arith.mulf %343, %344 : vector<2x6x6xf32>
    %346 = arith.addf %340, %345 : vector<2x6x6xf32>
    %c58 = arith.constant 58 : index
    %347 = memref.load %arg1[%c58] : memref<76xf32, #tpu.memory_space<smem>>
    %c11_232 = arith.constant 11 : index
    %c0_233 = arith.constant 0 : index
    %c0_234 = arith.constant 0 : index
    %c1_235 = arith.constant 1 : index
    %348 = vector.load %arg0[%c11_232, %c0_233, %c0_234, %c1_235] : memref<12x2x8x8xf32, #tpu.memory_space<vmem>>, vector<1x2x6x6xf32>
    %349 = vector.shape_cast %348 : vector<1x2x6x6xf32> to vector<2x6x6xf32>
    %350 = vector.broadcast %347 : f32 to vector<2x6x6xf32>
    %351 = arith.mulf %349, %350 : vector<2x6x6xf32>
    %352 = arith.addf %346, %351 : vector<2x6x6xf32>
    %c59 = arith.constant 59 : index
    %353 = memref.load %arg1[%c59] : memref<76xf32, #tpu.memory_space<smem>>
    %c8_236 = arith.constant 8 : index
    %c0_237 = arith.constant 0 : index
    %c0_238 = arith.constant 0 : index
    %c2_239 = arith.constant 2 : index
    %354 = vector.load %arg0[%c8_236, %c0_237, %c0_238, %c2_239] : memref<12x2x8x8xf32, #tpu.memory_space<vmem>>, vector<1x2x6x6xf32>
    %355 = vector.shape_cast %354 : vector<1x2x6x6xf32> to vector<2x6x6xf32>
    %356 = vector.broadcast %353 : f32 to vector<2x6x6xf32>
    %357 = arith.mulf %355, %356 : vector<2x6x6xf32>
    %358 = arith.addf %352, %357 : vector<2x6x6xf32>
    %c60 = arith.constant 60 : index
    %359 = memref.load %arg1[%c60] : memref<76xf32, #tpu.memory_space<smem>>
    %c2_240 = arith.constant 2 : index
    %c0_241 = arith.constant 0 : index
    %c1_242 = arith.constant 1 : index
    %c0_243 = arith.constant 0 : index
    %360 = vector.load %arg0[%c2_240, %c0_241, %c1_242, %c0_243] : memref<12x2x8x8xf32, #tpu.memory_space<vmem>>, vector<1x2x6x6xf32>
    %361 = vector.shape_cast %360 : vector<1x2x6x6xf32> to vector<2x6x6xf32>
    %362 = vector.broadcast %359 : f32 to vector<2x6x6xf32>
    %363 = arith.mulf %361, %362 : vector<2x6x6xf32>
    %364 = arith.addf %358, %363 : vector<2x6x6xf32>
    %c61 = arith.constant 61 : index
    %365 = memref.load %arg1[%c61] : memref<76xf32, #tpu.memory_space<smem>>
    %c5_244 = arith.constant 5 : index
    %c0_245 = arith.constant 0 : index
    %c1_246 = arith.constant 1 : index
    %c0_247 = arith.constant 0 : index
    %366 = vector.load %arg0[%c5_244, %c0_245, %c1_246, %c0_247] : memref<12x2x8x8xf32, #tpu.memory_space<vmem>>, vector<1x2x6x6xf32>
    %367 = vector.shape_cast %366 : vector<1x2x6x6xf32> to vector<2x6x6xf32>
    %368 = vector.broadcast %365 : f32 to vector<2x6x6xf32>
    %369 = arith.mulf %367, %368 : vector<2x6x6xf32>
    %370 = arith.addf %364, %369 : vector<2x6x6xf32>
    %c62 = arith.constant 62 : index
    %371 = memref.load %arg1[%c62] : memref<76xf32, #tpu.memory_space<smem>>
    %c2_248 = arith.constant 2 : index
    %c0_249 = arith.constant 0 : index
    %c1_250 = arith.constant 1 : index
    %c1_251 = arith.constant 1 : index
    %372 = vector.load %arg0[%c2_248, %c0_249, %c1_250, %c1_251] : memref<12x2x8x8xf32, #tpu.memory_space<vmem>>, vector<1x2x6x6xf32>
    %373 = vector.shape_cast %372 : vector<1x2x6x6xf32> to vector<2x6x6xf32>
    %374 = vector.broadcast %371 : f32 to vector<2x6x6xf32>
    %375 = arith.mulf %373, %374 : vector<2x6x6xf32>
    %376 = arith.addf %370, %375 : vector<2x6x6xf32>
    %c63 = arith.constant 63 : index
    %377 = memref.load %arg1[%c63] : memref<76xf32, #tpu.memory_space<smem>>
    %c5_252 = arith.constant 5 : index
    %c0_253 = arith.constant 0 : index
    %c1_254 = arith.constant 1 : index
    %c1_255 = arith.constant 1 : index
    %378 = vector.load %arg0[%c5_252, %c0_253, %c1_254, %c1_255] : memref<12x2x8x8xf32, #tpu.memory_space<vmem>>, vector<1x2x6x6xf32>
    %379 = vector.shape_cast %378 : vector<1x2x6x6xf32> to vector<2x6x6xf32>
    %380 = vector.broadcast %377 : f32 to vector<2x6x6xf32>
    %381 = arith.mulf %379, %380 : vector<2x6x6xf32>
    %382 = arith.addf %376, %381 : vector<2x6x6xf32>
    %c64 = arith.constant 64 : index
    %383 = memref.load %arg1[%c64] : memref<76xf32, #tpu.memory_space<smem>>
    %c2_256 = arith.constant 2 : index
    %c0_257 = arith.constant 0 : index
    %c1_258 = arith.constant 1 : index
    %c2_259 = arith.constant 2 : index
    %384 = vector.load %arg0[%c2_256, %c0_257, %c1_258, %c2_259] : memref<12x2x8x8xf32, #tpu.memory_space<vmem>>, vector<1x2x6x6xf32>
    %385 = vector.shape_cast %384 : vector<1x2x6x6xf32> to vector<2x6x6xf32>
    %386 = vector.broadcast %383 : f32 to vector<2x6x6xf32>
    %387 = arith.mulf %385, %386 : vector<2x6x6xf32>
    %388 = arith.addf %382, %387 : vector<2x6x6xf32>
    %c65 = arith.constant 65 : index
    %389 = memref.load %arg1[%c65] : memref<76xf32, #tpu.memory_space<smem>>
    %c8_260 = arith.constant 8 : index
    %c0_261 = arith.constant 0 : index
    %c1_262 = arith.constant 1 : index
    %c0_263 = arith.constant 0 : index
    %390 = vector.load %arg0[%c8_260, %c0_261, %c1_262, %c0_263] : memref<12x2x8x8xf32, #tpu.memory_space<vmem>>, vector<1x2x6x6xf32>
    %391 = vector.shape_cast %390 : vector<1x2x6x6xf32> to vector<2x6x6xf32>
    %392 = vector.broadcast %389 : f32 to vector<2x6x6xf32>
    %393 = arith.mulf %391, %392 : vector<2x6x6xf32>
    %394 = arith.addf %388, %393 : vector<2x6x6xf32>
    %c66 = arith.constant 66 : index
    %395 = memref.load %arg1[%c66] : memref<76xf32, #tpu.memory_space<smem>>
    %c11_264 = arith.constant 11 : index
    %c0_265 = arith.constant 0 : index
    %c1_266 = arith.constant 1 : index
    %c0_267 = arith.constant 0 : index
    %396 = vector.load %arg0[%c11_264, %c0_265, %c1_266, %c0_267] : memref<12x2x8x8xf32, #tpu.memory_space<vmem>>, vector<1x2x6x6xf32>
    %397 = vector.shape_cast %396 : vector<1x2x6x6xf32> to vector<2x6x6xf32>
    %398 = vector.broadcast %395 : f32 to vector<2x6x6xf32>
    %399 = arith.mulf %397, %398 : vector<2x6x6xf32>
    %400 = arith.addf %394, %399 : vector<2x6x6xf32>
    %c67 = arith.constant 67 : index
    %401 = memref.load %arg1[%c67] : memref<76xf32, #tpu.memory_space<smem>>
    %c8_268 = arith.constant 8 : index
    %c0_269 = arith.constant 0 : index
    %c1_270 = arith.constant 1 : index
    %c1_271 = arith.constant 1 : index
    %402 = vector.load %arg0[%c8_268, %c0_269, %c1_270, %c1_271] : memref<12x2x8x8xf32, #tpu.memory_space<vmem>>, vector<1x2x6x6xf32>
    %403 = vector.shape_cast %402 : vector<1x2x6x6xf32> to vector<2x6x6xf32>
    %404 = vector.broadcast %401 : f32 to vector<2x6x6xf32>
    %405 = arith.mulf %403, %404 : vector<2x6x6xf32>
    %406 = arith.addf %400, %405 : vector<2x6x6xf32>
    %c68 = arith.constant 68 : index
    %407 = memref.load %arg1[%c68] : memref<76xf32, #tpu.memory_space<smem>>
    %c11_272 = arith.constant 11 : index
    %c0_273 = arith.constant 0 : index
    %c1_274 = arith.constant 1 : index
    %c1_275 = arith.constant 1 : index
    %408 = vector.load %arg0[%c11_272, %c0_273, %c1_274, %c1_275] : memref<12x2x8x8xf32, #tpu.memory_space<vmem>>, vector<1x2x6x6xf32>
    %409 = vector.shape_cast %408 : vector<1x2x6x6xf32> to vector<2x6x6xf32>
    %410 = vector.broadcast %407 : f32 to vector<2x6x6xf32>
    %411 = arith.mulf %409, %410 : vector<2x6x6xf32>
    %412 = arith.addf %406, %411 : vector<2x6x6xf32>
    %c69 = arith.constant 69 : index
    %413 = memref.load %arg1[%c69] : memref<76xf32, #tpu.memory_space<smem>>
    %c8_276 = arith.constant 8 : index
    %c0_277 = arith.constant 0 : index
    %c1_278 = arith.constant 1 : index
    %c2_279 = arith.constant 2 : index
    %414 = vector.load %arg0[%c8_276, %c0_277, %c1_278, %c2_279] : memref<12x2x8x8xf32, #tpu.memory_space<vmem>>, vector<1x2x6x6xf32>
    %415 = vector.shape_cast %414 : vector<1x2x6x6xf32> to vector<2x6x6xf32>
    %416 = vector.broadcast %413 : f32 to vector<2x6x6xf32>
    %417 = arith.mulf %415, %416 : vector<2x6x6xf32>
    %418 = arith.addf %412, %417 : vector<2x6x6xf32>
    %c70 = arith.constant 70 : index
    %419 = memref.load %arg1[%c70] : memref<76xf32, #tpu.memory_space<smem>>
    %c2_280 = arith.constant 2 : index
    %c0_281 = arith.constant 0 : index
    %c2_282 = arith.constant 2 : index
    %c0_283 = arith.constant 0 : index
    %420 = vector.load %arg0[%c2_280, %c0_281, %c2_282, %c0_283] : memref<12x2x8x8xf32, #tpu.memory_space<vmem>>, vector<1x2x6x6xf32>
    %421 = vector.shape_cast %420 : vector<1x2x6x6xf32> to vector<2x6x6xf32>
    %422 = vector.broadcast %419 : f32 to vector<2x6x6xf32>
    %423 = arith.mulf %421, %422 : vector<2x6x6xf32>
    %424 = arith.addf %418, %423 : vector<2x6x6xf32>
    %c71 = arith.constant 71 : index
    %425 = memref.load %arg1[%c71] : memref<76xf32, #tpu.memory_space<smem>>
    %c5_284 = arith.constant 5 : index
    %c0_285 = arith.constant 0 : index
    %c2_286 = arith.constant 2 : index
    %c0_287 = arith.constant 0 : index
    %426 = vector.load %arg0[%c5_284, %c0_285, %c2_286, %c0_287] : memref<12x2x8x8xf32, #tpu.memory_space<vmem>>, vector<1x2x6x6xf32>
    %427 = vector.shape_cast %426 : vector<1x2x6x6xf32> to vector<2x6x6xf32>
    %428 = vector.broadcast %425 : f32 to vector<2x6x6xf32>
    %429 = arith.mulf %427, %428 : vector<2x6x6xf32>
    %430 = arith.addf %424, %429 : vector<2x6x6xf32>
    %c72 = arith.constant 72 : index
    %431 = memref.load %arg1[%c72] : memref<76xf32, #tpu.memory_space<smem>>
    %c2_288 = arith.constant 2 : index
    %c0_289 = arith.constant 0 : index
    %c2_290 = arith.constant 2 : index
    %c1_291 = arith.constant 1 : index
    %432 = vector.load %arg0[%c2_288, %c0_289, %c2_290, %c1_291] : memref<12x2x8x8xf32, #tpu.memory_space<vmem>>, vector<1x2x6x6xf32>
    %433 = vector.shape_cast %432 : vector<1x2x6x6xf32> to vector<2x6x6xf32>
    %434 = vector.broadcast %431 : f32 to vector<2x6x6xf32>
    %435 = arith.mulf %433, %434 : vector<2x6x6xf32>
    %436 = arith.addf %430, %435 : vector<2x6x6xf32>
    %c73 = arith.constant 73 : index
    %437 = memref.load %arg1[%c73] : memref<76xf32, #tpu.memory_space<smem>>
    %c5_292 = arith.constant 5 : index
    %c0_293 = arith.constant 0 : index
    %c2_294 = arith.constant 2 : index
    %c1_295 = arith.constant 1 : index
    %438 = vector.load %arg0[%c5_292, %c0_293, %c2_294, %c1_295] : memref<12x2x8x8xf32, #tpu.memory_space<vmem>>, vector<1x2x6x6xf32>
    %439 = vector.shape_cast %438 : vector<1x2x6x6xf32> to vector<2x6x6xf32>
    %440 = vector.broadcast %437 : f32 to vector<2x6x6xf32>
    %441 = arith.mulf %439, %440 : vector<2x6x6xf32>
    %442 = arith.addf %436, %441 : vector<2x6x6xf32>
    %c74 = arith.constant 74 : index
    %443 = memref.load %arg1[%c74] : memref<76xf32, #tpu.memory_space<smem>>
    %c2_296 = arith.constant 2 : index
    %c0_297 = arith.constant 0 : index
    %c2_298 = arith.constant 2 : index
    %c2_299 = arith.constant 2 : index
    %444 = vector.load %arg0[%c2_296, %c0_297, %c2_298, %c2_299] : memref<12x2x8x8xf32, #tpu.memory_space<vmem>>, vector<1x2x6x6xf32>
    %445 = vector.shape_cast %444 : vector<1x2x6x6xf32> to vector<2x6x6xf32>
    %446 = vector.broadcast %443 : f32 to vector<2x6x6xf32>
    %447 = arith.mulf %445, %446 : vector<2x6x6xf32>
    %448 = arith.addf %442, %447 : vector<2x6x6xf32>
    %c75 = arith.constant 75 : index
    %449 = memref.load %arg1[%c75] : memref<76xf32, #tpu.memory_space<smem>>
    %450 = vector.broadcast %449 : f32 to vector<2x6x6xf32>
    %451 = arith.addf %448, %450 : vector<2x6x6xf32>
    %452 = arith.negf %451 : vector<2x6x6xf32>
    %453 = math.exp %452 : vector<2x6x6xf32>
    %cst = arith.constant 1.000000e+00 : f32
    %454 = vector.broadcast %cst : f32 to vector<2x6x6xf32>
    %455 = arith.addf %454, %453 : vector<2x6x6xf32>
    %456 = arith.divf %454, %455 : vector<2x6x6xf32>
    %c0_300 = arith.constant 0 : index
    %c0_301 = arith.constant 0 : index
    %c0_302 = arith.constant 0 : index
    %457 = vector.load %arg2[%c0_300, %c0_301, %c0_302] : memref<2x6x6xf32, #tpu.memory_space<vmem>>, vector<2x6x6xf32>
    tpu.vector_store %arg2[%c0_300, %c0_301, %c0_302], %456 {strides = array<i32>} : memref<2x6x6xf32, #tpu.memory_space<vmem>>, vector<2x6x6xf32>,
    return
  }
}

</mosaic_0001>

<llo_original>
// kernel: squeeze.17
$region0: #{squeeze.17}
  %s0 = inlined_call_operand.vmem [shape: f32[1,3,5,5], index: 0, kind: input, shape index: {}]
  %s1 = inlined_call_operand.vmem [shape: f32[75], index: 1, kind: output, shape index: {}]
  $region1: #{squeeze.17} parent=0
    #allocation0 [shape = 'u8[4096]{0}', space=vmem, size = 0x1000, scoped, tag = 'scoped mem for output reshape']
    %v2 = vld [vmem:[%s0] sm:$0x1]
    %vm3 = vcmask 39936
    %4 = vst.msk [vmem:[#allocation0] sm:$0x1] %vm3, %v2
    %s5 = scalar_lea.vmem %s0, 20
    %v6 = vld [vmem:[%s5] sm:$0x1]
    %7 = vrot.lane.b32.xlu0 %v6, 70
    %v8 = vpop.permute.xlu0 %7
    %vm9 = vcmask 613936
    %10 = vst.msk [vmem:[#allocation0] sm:$0x1] %vm9, %v8
    %s11 = scalar_lea.vmem %s0, 19
    %v12 = vld [vmem:[%s11] sm:$0x1]
    %13 = vrot.lane.b32.xlu0 %v12, 65
    %v14 = vpop.permute.xlu0 %13
    %vm15 = vcmask 572936
    %16 = vst.msk [vmem:[#allocation0] sm:$0x1] %vm15, %v14
    %s17 = scalar_lea.vmem %s0, 18
    %v18 = vld [vmem:[%s17] sm:$0x1]
    %19 = vrot.lane.b32.xlu0 %v18, 60
    %v20 = vpop.permute.xlu0 %19
    %vm21 = vcmask 531936
    %22 = vst.msk [vmem:[#allocation0] sm:$0x1] %vm21, %v20
    %s23 = scalar_lea.vmem %s0, 17
    %v24 = vld [vmem:[%s23] sm:$0x1]
    %25 = vrot.lane.b32.xlu0 %v24, 55
    %v26 = vpop.permute.xlu0 %25
    %vm27 = vcmask 490936
    %28 = vst.msk [vmem:[#allocation0] sm:$0x1] %vm27, %v26
    %s29 = scalar_lea.vmem %s0, 16
    %v30 = vld [vmem:[%s29] sm:$0x1]
    %31 = vrot.lane.b32.xlu0 %v30, 50
    %v32 = vpop.permute.xlu0 %31
    %vm33 = vcmask 449936
    %34 = vst.msk [vmem:[#allocation0] sm:$0x1] %vm33, %v32
    %s35 = scalar_lea.vmem %s0, 12
    %v36 = vld [vmem:[%s35] sm:$0x1]
    %37 = vrot.lane.b32.xlu0 %v36, 45
    %v38 = vpop.permute.xlu0 %37
    %vm39 = vcmask 408936
    %40 = vst.msk [vmem:[#allocation0] sm:$0x1] %vm39, %v38
    %s41 = scalar_lea.vmem %s0, 11
    %v42 = vld [vmem:[%s41] sm:$0x1]
    %43 = vrot.lane.b32.xlu0 %v42, 40
    %v44 = vpop.permute.xlu0 %43
    %vm45 = vcmask 367936
    %46 = vst.msk [vmem:[#allocation0] sm:$0x1] %vm45, %v44
    %s47 = scalar_lea.vmem %s0, 10
    %v48 = vld [vmem:[%s47] sm:$0x1]
    %49 = vrot.lane.b32.xlu0 %v48, 35
    %v50 = vpop.permute.xlu0 %49
    %vm51 = vcmask 326936
    %52 = vst.msk [vmem:[#allocation0] sm:$0x1] %vm51, %v50
    %s53 = scalar_lea.vmem %s0, 9
    %v54 = vld [vmem:[%s53] sm:$0x1]
    %55 = vrot.lane.b32.xlu0 %v54, 30
    %v56 = vpop.permute.xlu0 %55
    %vm57 = vcmask 285936
    %58 = vst.msk [vmem:[#allocation0] sm:$0x1] %vm57, %v56
    %s59 = scalar_lea.vmem %s0, 8
    %v60 = vld [vmem:[%s59] sm:$0x1]
    %61 = vrot.lane.b32.xlu0 %v60, 25
    %v62 = vpop.permute.xlu0 %61
    %vm63 = vcmask 244936
    %64 = vst.msk [vmem:[#allocation0] sm:$0x1] %vm63, %v62
    %s65 = scalar_lea.vmem %s0, 4
    %v66 = vld [vmem:[%s65] sm:$0x1]
    %67 = vrot.lane.b32.xlu0 %v66, 20
    %v68 = vpop.permute.xlu0 %67
    %vm69 = vcmask 203936
    %70 = vst.msk [vmem:[#allocation0] sm:$0x1] %vm69, %v68
    %s71 = scalar_lea.vmem %s0, 3
    %v72 = vld [vmem:[%s71] sm:$0x1]
    %73 = vrot.lane.b32.xlu0 %v72, 15
    %v74 = vpop.permute.xlu0 %73
    %vm75 = vcmask 162936
    %76 = vst.msk [vmem:[#allocation0] sm:$0x1] %vm75, %v74
    %s77 = scalar_lea.vmem %s0, 2
    %v78 = vld [vmem:[%s77] sm:$0x1]
    %79 = vrot.lane.b32.xlu0 %v78, 10
    %v80 = vpop.permute.xlu0 %79
    %vm81 = vcmask 121936
    %82 = vst.msk [vmem:[#allocation0] sm:$0x1] %vm81, %v80
    %s83 = scalar_lea.vmem %s0, 1
    %v84 = vld [vmem:[%s83] sm:$0x1]
    %85 = vrot.lane.b32.xlu0 %v84, 5
    %v86 = vpop.permute.xlu0 %85
    %vm87 = vcmask 80936
    %88 = vst.msk [vmem:[#allocation0] sm:$0x1] %vm87, %v86
    %s90 = sshllo.u32 0, 1
    %v92 = vld [vmem:[#allocation0] sm:%s90]
    %s93 = sshllo.u32 0, 1
    %94 = vst [vmem:[%s1] sm:%s93] %v92

// kernel: model_forward.1
$region0: #{model_forward.1}
  #allocation0 [shape = 'u32[]', space=smem, size = 0x4, offset = 0x4, fixed_abs, tag = 'smem constant byte address 0x4 - core index']
  #allocation1 [shape = 'u32[144,128]{1,0:T(1,128)}', space=vmem, size = 0x12000, scoped, tag = 'internal scratch']
  %s0 = inlined_call_operand.vmem [shape: f32[12,2,8,8], index: 0, kind: input, shape index: {}]
  %s1 = inlined_call_operand.vmem [shape: f32[76], index: 1, kind: input, shape index: {}]
  %s2 = inlined_call_operand.vmem [shape: f32[2,6,6], index: 2, kind: output, shape index: {}]
  %s3 = sld [smem:[#allocation0]]
  $region22: #{model_forward.1} parent=0
    _
  %s5 = ssub.s32 1, %s3
  %s6 = scalar_select 0, %s5, %s3
  $region1: #{model_forward.1} parent=0
    #allocation2 [shape = 'u8[512]{0}', space=smem, size = 0x200, scoped, tag = 'input window, operand 1, single buffered']
    #allocation3 [shape = 's32[1]{0}', space=sflag, size = 0x4, scoped, tag = 'scoped memory for model_forward.1']
    %7 = vsyncpa [#allocation3], 0
    // Predicated region
    $region2: #{model_forward.1} parent=1 // pred_check
      _
    $region3: #{model_forward.1} parent=1 // pred_check_branch
      %9 = sbr.rel (0) target = $region5
    $region4: #{model_forward.1} parent=1 // pred_region
      _
    $region5: #{model_forward.1} parent=1 // pred_fallthru
      _
    // Predicated region
    $region6: #{model_forward.1} parent=1 // pred_check
      _
    $region7: #{model_forward.1} parent=1 // pred_check_branch
      %11 = sbr.rel (0) target = $region9
    $region8: #{model_forward.1} parent=1 // pred_region
      %s13 = ssub.s32 16, 16
      %14 = vsyncadd [#allocation3], %s13
      %s16 = sshll.u32 %s1, 4
      %s17 = int_to_ptr.vmem [resolvable:$true] %s16
      %19 = dma.vmem_to_smem %s17, 16, [#allocation2], [#allocation3]
    $region9: #{model_forward.1} parent=1 // pred_fallthru
      _
    // Predicated region
    $region10: #{model_forward.1} parent=1 // pred_check
      _
    $region11: #{model_forward.1} parent=1 // pred_check_branch
      %21 = sbr.rel (0) target = $region13
    $region12: #{model_forward.1} parent=1 // pred_region
      %22 = dma.done [#allocation3], 16
    $region13: #{model_forward.1} parent=1 // pred_fallthru
      _
    %23 = sfence
    %s24 = sld [smem:[#allocation2]]
    %v25 = vld [vmem:[%s0] sm:$0x3f]
    %v26 = vld [vmem:[%s0 + $0x8] sm:$0x3f]
    %v27 = vstv %s24
    %v28 = vmul.f32 %v25, %v27
    %v29 = vmul.f32 %v26, %v27
    %s30 = sld [smem:[#allocation2 + $0x1]]
    %s31 = scalar_lea.vmem %s0, 48
    %v32 = vld [vmem:[%s31] sm:$0x3f]
    %v33 = vld [vmem:[%s31 + $0x8] sm:$0x3f]
    %v34 = vstv %s30
    %v35 = vmul.f32 %v32, %v34
    %v36 = vmul.f32 %v33, %v34
    %v37 = vadd.f32 %v28, %v35
    %v38 = vadd.f32 %v29, %v36
    %s39 = sld [smem:[#allocation2 + $0x2]]
    %v40 = vstv %s39
    %v41 = vmul.f32 %v25, %v40
    %v42 = vmul.f32 %v26, %v40
    %45 = vrot.lane.b32.xlu0 %v41, 127
    %v46 = vpop.permute.xlu0 %45
    %47 = vrot.lane.b32.xlu0 %v42, 127
    %v48 = vpop.permute.xlu0 %47
    %v51 = vadd.f32 %v37, %v46
    %v52 = vadd.f32 %v38, %v48
    %s53 = sld [smem:[#allocation2 + $0x3]]
    %v54 = vstv %s53
    %v55 = vmul.f32 %v32, %v54
    %v56 = vmul.f32 %v33, %v54
    %59 = vrot.lane.b32.xlu0 %v55, 127
    %v60 = vpop.permute.xlu0 %59
    %61 = vrot.lane.b32.xlu0 %v56, 127
    %v62 = vpop.permute.xlu0 %61
    %v65 = vadd.f32 %v51, %v60
    %v66 = vadd.f32 %v52, %v62
    %s67 = sld [smem:[#allocation2 + $0x4]]
    %v68 = vstv %s67
    %v69 = vmul.f32 %v25, %v68
    %v70 = vmul.f32 %v26, %v68
    %73 = vrot.lane.b32.xlu0 %v69, 126
    %v74 = vpop.permute.xlu0 %73
    %75 = vrot.lane.b32.xlu0 %v70, 126
    %v76 = vpop.permute.xlu0 %75
    %v79 = vadd.f32 %v65, %v74
    %v80 = vadd.f32 %v66, %v76
    %s81 = sld [smem:[#allocation2 + $0x5]]
    %s82 = scalar_lea.vmem %s0, 96
    %v83 = vld [vmem:[%s82] sm:$0x3f]
    %v84 = vld [vmem:[%s82 + $0x8] sm:$0x3f]
    %v85 = vstv %s81
    %v86 = vmul.f32 %v83, %v85
    %v87 = vmul.f32 %v84, %v85
    %v88 = vadd.f32 %v79, %v86
    %v89 = vadd.f32 %v80, %v87
    %s90 = sld [smem:[#allocation2 + $0x6]]
    %s91 = scalar_lea.vmem %s0, 144
    %v92 = vld [vmem:[%s91] sm:$0x3f]
    %v93 = vld [vmem:[%s91 + $0x8] sm:$0x3f]
    %v94 = vstv %s90
    %v95 = vmul.f32 %v92, %v94
    %v96 = vmul.f32 %v93, %v94
    %v97 = vadd.f32 %v88, %v95
    %v98 = vadd.f32 %v89, %v96
    %s99 = sld [smem:[#allocation2 + $0x7]]
    %v100 = vstv %s99
    %v101 = vmul.f32 %v83, %v100
    %v102 = vmul.f32 %v84, %v100
    %105 = vrot.lane.b32.xlu0 %v101, 127
    %v106 = vpop.permute.xlu0 %105
    %107 = vrot.lane.b32.xlu0 %v102, 127
    %v108 = vpop.permute.xlu0 %107
    %v111 = vadd.f32 %v97, %v106
    %v112 = vadd.f32 %v98, %v108
    %s113 = sld [smem:[#allocation2 + $0x8]]
    %v114 = vstv %s113
    %v115 = vmul.f32 %v92, %v114
    %v116 = vmul.f32 %v93, %v114
    %119 = vrot.lane.b32.xlu0 %v115, 127
    %v120 = vpop.permute.xlu0 %119
    %121 = vrot.lane.b32.xlu0 %v116, 127
    %v122 = vpop.permute.xlu0 %121
    %v125 = vadd.f32 %v111, %v120
    %v126 = vadd.f32 %v112, %v122
    %s127 = sld [smem:[#allocation2 + $0x9]]
    %v128 = vstv %s127
    %v129 = vmul.f32 %v83, %v128
    %v130 = vmul.f32 %v84, %v128
    %133 = vrot.lane.b32.xlu0 %v129, 126
    %v134 = vpop.permute.xlu0 %133
    %135 = vrot.lane.b32.xlu0 %v130, 126
    %v136 = vpop.permute.xlu0 %135
    %v139 = vadd.f32 %v125, %v134
    %v140 = vadd.f32 %v126, %v136
    %s141 = sld [smem:[#allocation2 + $0xa]]
    %v142 = vld [vmem:[%s0 + $0x1] sm:$0x3f]
    %v143 = vld [vmem:[%s0 + $0x9] sm:$0x3f]
    %v144 = vstv %s141
    %v145 = vmul.f32 %v142, %v144
    %v146 = vmul.f32 %v143, %v144
    %v147 = vadd.f32 %v139, %v145
    %v148 = vadd.f32 %v140, %v146
    %s149 = sld [smem:[#allocation2 + $0xb]]
    %v150 = vld [vmem:[%s31 + $0x1] sm:$0x3f]
    %v151 = vld [vmem:[%s31 + $0x9] sm:$0x3f]
    %v152 = vstv %s149
    %v153 = vmul.f32 %v150, %v152
    %v154 = vmul.f32 %v151, %v152
    %v155 = vadd.f32 %v147, %v153
    %v156 = vadd.f32 %v148, %v154
    %s157 = sld [smem:[#allocation2 + $0xc]]
    %v158 = vstv %s157
    %v159 = vmul.f32 %v142, %v158
    %v160 = vmul.f32 %v143, %v158
    %163 = vrot.lane.b32.xlu0 %v159, 127
    %v164 = vpop.permute.xlu0 %163
    %165 = vrot.lane.b32.xlu0 %v160, 127
    %v166 = vpop.permute.xlu0 %165
    %v169 = vadd.f32 %v155, %v164
    %v170 = vadd.f32 %v156, %v166
    %s171 = sld [smem:[#allocation2 + $0xd]]
    %v172 = vstv %s171
    %v173 = vmul.f32 %v150, %v172
    %v174 = vmul.f32 %v151, %v172
    %177 = vrot.lane.b32.xlu0 %v173, 127
    %v178 = vpop.permute.xlu0 %177
    %179 = vrot.lane.b32.xlu0 %v174, 127
    %v180 = vpop.permute.xlu0 %179
    %v183 = vadd.f32 %v169, %v178
    %v184 = vadd.f32 %v170, %v180
    %s185 = sld [smem:[#allocation2 + $0xe]]
    %v186 = vstv %s185
    %v187 = vmul.f32 %v142, %v186
    %v188 = vmul.f32 %v143, %v186
    %191 = vrot.lane.b32.xlu0 %v187, 126
    %v192 = vpop.permute.xlu0 %191
    %193 = vrot.lane.b32.xlu0 %v188, 126
    %v194 = vpop.permute.xlu0 %193
    %v197 = vadd.f32 %v183, %v192
    %v198 = vadd.f32 %v184, %v194
    %s199 = sld [smem:[#allocation2 + $0xf]]
    %v200 = vld [vmem:[%s82 + $0x1] sm:$0x3f]
    %v201 = vld [vmem:[%s82 + $0x9] sm:$0x3f]
    %v202 = vstv %s199
    %v203 = vmul.f32 %v200, %v202
    %v204 = vmul.f32 %v201, %v202
    %v205 = vadd.f32 %v197, %v203
    %v206 = vadd.f32 %v198, %v204
    %s207 = sld [smem:[#allocation2 + $0x10]]
    %v208 = vld [vmem:[%s91 + $0x1] sm:$0x3f]
    %v209 = vld [vmem:[%s91 + $0x9] sm:$0x3f]
    %v210 = vstv %s207
    %v211 = vmul.f32 %v208, %v210
    %v212 = vmul.f32 %v209, %v210
    %v213 = vadd.f32 %v205, %v211
    %v214 = vadd.f32 %v206, %v212
    %s215 = sld [smem:[#allocation2 + $0x11]]
    %v216 = vstv %s215
    %v217 = vmul.f32 %v200, %v216
    %v218 = vmul.f32 %v201, %v216
    %221 = vrot.lane.b32.xlu0 %v217, 127
    %v222 = vpop.permute.xlu0 %221
    %223 = vrot.lane.b32.xlu0 %v218, 127
    %v224 = vpop.permute.xlu0 %223
    %v227 = vadd.f32 %v213, %v222
    %v228 = vadd.f32 %v214, %v224
    %s229 = sld [smem:[#allocation2 + $0x12]]
    %v230 = vstv %s229
    %v231 = vmul.f32 %v208, %v230
    %v232 = vmul.f32 %v209, %v230
    %235 = vrot.lane.b32.xlu0 %v231, 127
    %v236 = vpop.permute.xlu0 %235
    %237 = vrot.lane.b32.xlu0 %v232, 127
    %v238 = vpop.permute.xlu0 %237
    %v241 = vadd.f32 %v227, %v236
    %v242 = vadd.f32 %v228, %v238
    %s243 = sld [smem:[#allocation2 + $0x13]]
    %v244 = vstv %s243
    %v245 = vmul.f32 %v200, %v244
    %v246 = vmul.f32 %v201, %v244
    %249 = vrot.lane.b32.xlu0 %v245, 126
    %v250 = vpop.permute.xlu0 %249
    %251 = vrot.lane.b32.xlu0 %v246, 126
    %v252 = vpop.permute.xlu0 %251
    %v255 = vadd.f32 %v241, %v250
    %v256 = vadd.f32 %v242, %v252
    %s257 = sld [smem:[#allocation2 + $0x14]]
    %v258 = vld [vmem:[%s0 + $0x2] sm:$0x3f]
    %v259 = vld [vmem:[%s0 + $0xa] sm:$0x3f]
    %v260 = vstv %s257
    %v261 = vmul.f32 %v258, %v260
    %v262 = vmul.f32 %v259, %v260
    %v263 = vadd.f32 %v255, %v261
    %v264 = vadd.f32 %v256, %v262
    %s265 = sld [smem:[#allocation2 + $0x15]]
    %v266 = vld [vmem:[%s31 + $0x2] sm:$0x3f]
    %v267 = vld [vmem:[%s31 + $0xa] sm:$0x3f]
    %v268 = vstv %s265
    %v269 = vmul.f32 %v266, %v268
    %v270 = vmul.f32 %v267, %v268
    %v271 = vadd.f32 %v263, %v269
    %v272 = vadd.f32 %v264, %v270
    %s273 = sld [smem:[#allocation2 + $0x16]]
    %v274 = vstv %s273
    %v275 = vmul.f32 %v258, %v274
    %v276 = vmul.f32 %v259, %v274
    %279 = vrot.lane.b32.xlu0 %v275, 127
    %v280 = vpop.permute.xlu0 %279
    %281 = vrot.lane.b32.xlu0 %v276, 127
    %v282 = vpop.permute.xlu0 %281
    %v285 = vadd.f32 %v271, %v280
    %v286 = vadd.f32 %v272, %v282
    %s287 = sld [smem:[#allocation2 + $0x17]]
    %v288 = vstv %s287
    %v289 = vmul.f32 %v266, %v288
    %v290 = vmul.f32 %v267, %v288
    %293 = vrot.lane.b32.xlu0 %v289, 127
    %v294 = vpop.permute.xlu0 %293
    %295 = vrot.lane.b32.xlu0 %v290, 127
    %v296 = vpop.permute.xlu0 %295
    %v299 = vadd.f32 %v285, %v294
    %v300 = vadd.f32 %v286, %v296
    %s301 = sld [smem:[#allocation2 + $0x18]]
    %v302 = vstv %s301
    %v303 = vmul.f32 %v258, %v302
    %v304 = vmul.f32 %v259, %v302
    %307 = vrot.lane.b32.xlu0 %v303, 126
    %v308 = vpop.permute.xlu0 %307
    %309 = vrot.lane.b32.xlu0 %v304, 126
    %v310 = vpop.permute.xlu0 %309
    %v313 = vadd.f32 %v299, %v308
    %v314 = vadd.f32 %v300, %v310
    %s315 = sld [smem:[#allocation2 + $0x19]]
    %s316 = scalar_lea.vmem %s0, 16
    %v317 = vld [vmem:[%s316] sm:$0x3f]
    %v318 = vld [vmem:[%s316 + $0x8] sm:$0x3f]
    %v319 = vstv %s315
    %v320 = vmul.f32 %v317, %v319
    %v321 = vmul.f32 %v318, %v319
    %v322 = vadd.f32 %v313, %v320
    %v323 = vadd.f32 %v314, %v321
    %s324 = sld [smem:[#allocation2 + $0x1a]]
    %s325 = scalar_lea.vmem %s0, 64
    %v326 = vld [vmem:[%s325] sm:$0x3f]
    %v327 = vld [vmem:[%s325 + $0x8] sm:$0x3f]
    %v328 = vstv %s324
    %v329 = vmul.f32 %v326, %v328
    %v330 = vmul.f32 %v327, %v328
    %v331 = vadd.f32 %v322, %v329
    %v332 = vadd.f32 %v323, %v330
    %s333 = sld [smem:[#allocation2 + $0x1b]]
    %v334 = vstv %s333
    %v335 = vmul.f32 %v317, %v334
    %v336 = vmul.f32 %v318, %v334
    %339 = vrot.lane.b32.xlu0 %v335, 127
    %v340 = vpop.permute.xlu0 %339
    %341 = vrot.lane.b32.xlu0 %v336, 127
    %v342 = vpop.permute.xlu0 %341
    %v345 = vadd.f32 %v331, %v340
    %v346 = vadd.f32 %v332, %v342
    %s347 = sld [smem:[#allocation2 + $0x1c]]
    %v348 = vstv %s347
    %v349 = vmul.f32 %v326, %v348
    %v350 = vmul.f32 %v327, %v348
    %353 = vrot.lane.b32.xlu0 %v349, 127
    %v354 = vpop.permute.xlu0 %353
    %355 = vrot.lane.b32.xlu0 %v350, 127
    %v356 = vpop.permute.xlu0 %355
    %v359 = vadd.f32 %v345, %v354
    %v360 = vadd.f32 %v346, %v356
    %s361 = sld [smem:[#allocation2 + $0x1d]]
    %v362 = vstv %s361
    %v363 = vmul.f32 %v317, %v362
    %v364 = vmul.f32 %v318, %v362
    %367 = vrot.lane.b32.xlu0 %v363, 126
    %v368 = vpop.permute.xlu0 %367
    %369 = vrot.lane.b32.xlu0 %v364, 126
    %v370 = vpop.permute.xlu0 %369
    %v373 = vadd.f32 %v359, %v368
    %v374 = vadd.f32 %v360, %v370
    %s375 = sld [smem:[#allocation2 + $0x1e]]
    %s376 = scalar_lea.vmem %s0, 112
    %v377 = vld [vmem:[%s376] sm:$0x3f]
    %v378 = vld [vmem:[%s376 + $0x8] sm:$0x3f]
    %v379 = vstv %s375
    %v380 = vmul.f32 %v377, %v379
    %v381 = vmul.f32 %v378, %v379
    %v382 = vadd.f32 %v373, %v380
    %v383 = vadd.f32 %v374, %v381
    %s384 = sld [smem:[#allocation2 + $0x1f]]
    %s385 = scalar_lea.vmem %s0, 160
    %v386 = vld [vmem:[%s385] sm:$0x3f]
    %v387 = vld [vmem:[%s385 + $0x8] sm:$0x3f]
    %v388 = vstv %s384
    %v389 = vmul.f32 %v386, %v388
    %v390 = vmul.f32 %v387, %v388
    %v391 = vadd.f32 %v382, %v389
    %v392 = vadd.f32 %v383, %v390
    %s393 = sld [smem:[#allocation2 + $0x20]]
    %v394 = vstv %s393
    %v395 = vmul.f32 %v377, %v394
    %v396 = vmul.f32 %v378, %v394
    %399 = vrot.lane.b32.xlu0 %v395, 127
    %v400 = vpop.permute.xlu0 %399
    %401 = vrot.lane.b32.xlu0 %v396, 127
    %v402 = vpop.permute.xlu0 %401
    %v405 = vadd.f32 %v391, %v400
    %v406 = vadd.f32 %v392, %v402
    %s407 = sld [smem:[#allocation2 + $0x21]]
    %v408 = vstv %s407
    %v409 = vmul.f32 %v386, %v408
    %v410 = vmul.f32 %v387, %v408
    %413 = vrot.lane.b32.xlu0 %v409, 127
    %v414 = vpop.permute.xlu0 %413
    %415 = vrot.lane.b32.xlu0 %v410, 127
    %v416 = vpop.permute.xlu0 %415
    %v419 = vadd.f32 %v405, %v414
    %v420 = vadd.f32 %v406, %v416
    %s421 = sld [smem:[#allocation2 + $0x22]]
    %v422 = vstv %s421
    %v423 = vmul.f32 %v377, %v422
    %v424 = vmul.f32 %v378, %v422
    %427 = vrot.lane.b32.xlu0 %v423, 126
    %v428 = vpop.permute.xlu0 %427
    %429 = vrot.lane.b32.xlu0 %v424, 126
    %v430 = vpop.permute.xlu0 %429
    %v433 = vadd.f32 %v419, %v428
    %v434 = vadd.f32 %v420, %v430
    %s435 = sld [smem:[#allocation2 + $0x23]]
    %v436 = vld [vmem:[%s316 + $0x1] sm:$0x3f]
    %v437 = vld [vmem:[%s316 + $0x9] sm:$0x3f]
    %v438 = vstv %s435
    %v439 = vmul.f32 %v436, %v438
    %v440 = vmul.f32 %v437, %v438
    %v441 = vadd.f32 %v433, %v439
    %v442 = vadd.f32 %v434, %v440
    %s443 = sld [smem:[#allocation2 + $0x24]]
    %v444 = vld [vmem:[%s325 + $0x1] sm:$0x3f]
    %v445 = vld [vmem:[%s325 + $0x9] sm:$0x3f]
    %v446 = vstv %s443
    %v447 = vmul.f32 %v444, %v446
    %v448 = vmul.f32 %v445, %v446
    %v449 = vadd.f32 %v441, %v447
    %v450 = vadd.f32 %v442, %v448
    %s451 = sld [smem:[#allocation2 + $0x25]]
    %v452 = vstv %s451
    %v453 = vmul.f32 %v436, %v452
    %v454 = vmul.f32 %v437, %v452
    %457 = vrot.lane.b32.xlu0 %v453, 127
    %v458 = vpop.permute.xlu0 %457
    %459 = vrot.lane.b32.xlu0 %v454, 127
    %v460 = vpop.permute.xlu0 %459
    %v463 = vadd.f32 %v449, %v458
    %v464 = vadd.f32 %v450, %v460
    %s465 = sld [smem:[#allocation2 + $0x26]]
    %v466 = vstv %s465
    %v467 = vmul.f32 %v444, %v466
    %v468 = vmul.f32 %v445, %v466
    %471 = vrot.lane.b32.xlu0 %v467, 127
    %v472 = vpop.permute.xlu0 %471
    %473 = vrot.lane.b32.xlu0 %v468, 127
    %v474 = vpop.permute.xlu0 %473
    %v477 = vadd.f32 %v463, %v472
    %v478 = vadd.f32 %v464, %v474
    %s479 = sld [smem:[#allocation2 + $0x27]]
    %v480 = vstv %s479
    %v481 = vmul.f32 %v436, %v480
    %v482 = vmul.f32 %v437, %v480
    %485 = vrot.lane.b32.xlu0 %v481, 126
    %v486 = vpop.permute.xlu0 %485
    %487 = vrot.lane.b32.xlu0 %v482, 126
    %v488 = vpop.permute.xlu0 %487
    %v491 = vadd.f32 %v477, %v486
    %v492 = vadd.f32 %v478, %v488
    %s493 = sld [smem:[#allocation2 + $0x28]]
    %v494 = vld [vmem:[%s376 + $0x1] sm:$0x3f]
    %v495 = vld [vmem:[%s376 + $0x9] sm:$0x3f]
    %v496 = vstv %s493
    %v497 = vmul.f32 %v494, %v496
    %v498 = vmul.f32 %v495, %v496
    %v499 = vadd.f32 %v491, %v497
    %v500 = vadd.f32 %v492, %v498
    %s501 = sld [smem:[#allocation2 + $0x29]]
    %v502 = vld [vmem:[%s385 + $0x1] sm:$0x3f]
    %v503 = vld [vmem:[%s385 + $0x9] sm:$0x3f]
    %v504 = vstv %s501
    %v505 = vmul.f32 %v502, %v504
    %v506 = vmul.f32 %v503, %v504
    %v507 = vadd.f32 %v499, %v505
    %v508 = vadd.f32 %v500, %v506
    %s509 = sld [smem:[#allocation2 + $0x2a]]
    %v510 = vstv %s509
    %v511 = vmul.f32 %v494, %v510
    %v512 = vmul.f32 %v495, %v510
    %515 = vrot.lane.b32.xlu0 %v511, 127
    %v516 = vpop.permute.xlu0 %515
    %517 = vrot.lane.b32.xlu0 %v512, 127
    %v518 = vpop.permute.xlu0 %517
    %v521 = vadd.f32 %v507, %v516
    %v522 = vadd.f32 %v508, %v518
    %s523 = sld [smem:[#allocation2 + $0x2b]]
    %v524 = vstv %s523
    %v525 = vmul.f32 %v502, %v524
    %v526 = vmul.f32 %v503, %v524
    %529 = vrot.lane.b32.xlu0 %v525, 127
    %v530 = vpop.permute.xlu0 %529
    %531 = vrot.lane.b32.xlu0 %v526, 127
    %v532 = vpop.permute.xlu0 %531
    %v535 = vadd.f32 %v521, %v530
    %v536 = vadd.f32 %v522, %v532
    %s537 = sld [smem:[#allocation2 + $0x2c]]
    %v538 = vstv %s537
    %v539 = vmul.f32 %v494, %v538
    %v540 = vmul.f32 %v495, %v538
    %543 = vrot.lane.b32.xlu0 %v539, 126
    %v544 = vpop.permute.xlu0 %543
    %545 = vrot.lane.b32.xlu0 %v540, 126
    %v546 = vpop.permute.xlu0 %545
    %v549 = vadd.f32 %v535, %v544
    %v550 = vadd.f32 %v536, %v546
    %s551 = sld [smem:[#allocation2 + $0x2d]]
    %v552 = vld [vmem:[%s316 + $0x2] sm:$0x3f]
    %v553 = vld [vmem:[%s316 + $0xa] sm:$0x3f]
    %v554 = vstv %s551
    %v555 = vmul.f32 %v552, %v554
    %v556 = vmul.f32 %v553, %v554
    %v557 = vadd.f32 %v549, %v555
    %v558 = vadd.f32 %v550, %v556
    %s559 = sld [smem:[#allocation2 + $0x2e]]
    %v560 = vld [vmem:[%s325 + $0x2] sm:$0x3f]
    %v561 = vld [vmem:[%s325 + $0xa] sm:$0x3f]
    %v562 = vstv %s559
    %v563 = vmul.f32 %v560, %v562
    %v564 = vmul.f32 %v561, %v562
    %v565 = vadd.f32 %v557, %v563
    %v566 = vadd.f32 %v558, %v564
    %s567 = sld [smem:[#allocation2 + $0x2f]]
    %v568 = vstv %s567
    %v569 = vmul.f32 %v552, %v568
    %v570 = vmul.f32 %v553, %v568
    %573 = vrot.lane.b32.xlu0 %v569, 127
    %v574 = vpop.permute.xlu0 %573
    %575 = vrot.lane.b32.xlu0 %v570, 127
    %v576 = vpop.permute.xlu0 %575
    %v579 = vadd.f32 %v565, %v574
    %v580 = vadd.f32 %v566, %v576
    %s581 = sld [smem:[#allocation2 + $0x30]]
    %v582 = vstv %s581
    %v583 = vmul.f32 %v560, %v582
    %v584 = vmul.f32 %v561, %v582
    %587 = vrot.lane.b32.xlu0 %v583, 127
    %v588 = vpop.permute.xlu0 %587
    %589 = vrot.lane.b32.xlu0 %v584, 127
    %v590 = vpop.permute.xlu0 %589
    %v593 = vadd.f32 %v579, %v588
    %v594 = vadd.f32 %v580, %v590
    %s595 = sld [smem:[#allocation2 + $0x31]]
    %v596 = vstv %s595
    %v597 = vmul.f32 %v552, %v596
    %v598 = vmul.f32 %v553, %v596
    %601 = vrot.lane.b32.xlu0 %v597, 126
    %v602 = vpop.permute.xlu0 %601
    %603 = vrot.lane.b32.xlu0 %v598, 126
    %v604 = vpop.permute.xlu0 %603
    %v607 = vadd.f32 %v593, %v602
    %v608 = vadd.f32 %v594, %v604
    %s609 = sld [smem:[#allocation2 + $0x32]]
    %s610 = scalar_lea.vmem %s0, 32
    %v611 = vld [vmem:[%s610] sm:$0x3f]
    %v612 = vld [vmem:[%s610 + $0x8] sm:$0x3f]
    %v613 = vstv %s609
    %v614 = vmul.f32 %v611, %v613
    %v615 = vmul.f32 %v612, %v613
    %v616 = vadd.f32 %v607, %v614
    %v617 = vadd.f32 %v608, %v615
    %s618 = sld [smem:[#allocation2 + $0x33]]
    %s619 = scalar_lea.vmem %s0, 80
    %v620 = vld [vmem:[%s619] sm:$0x3f]
    %v621 = vld [vmem:[%s619 + $0x8] sm:$0x3f]
    %v622 = vstv %s618
    %v623 = vmul.f32 %v620, %v622
    %v624 = vmul.f32 %v621, %v622
    %v625 = vadd.f32 %v616, %v623
    %v626 = vadd.f32 %v617, %v624
    %s627 = sld [smem:[#allocation2 + $0x34]]
    %v628 = vstv %s627
    %v629 = vmul.f32 %v611, %v628
    %v630 = vmul.f32 %v612, %v628
    %633 = vrot.lane.b32.xlu0 %v629, 127
    %v634 = vpop.permute.xlu0 %633
    %635 = vrot.lane.b32.xlu0 %v630, 127
    %v636 = vpop.permute.xlu0 %635
    %v639 = vadd.f32 %v625, %v634
    %v640 = vadd.f32 %v626, %v636
    %s641 = sld [smem:[#allocation2 + $0x35]]
    %v642 = vstv %s641
    %v643 = vmul.f32 %v620, %v642
    %v644 = vmul.f32 %v621, %v642
    %647 = vrot.lane.b32.xlu0 %v643, 127
    %v648 = vpop.permute.xlu0 %647
    %649 = vrot.lane.b32.xlu0 %v644, 127
    %v650 = vpop.permute.xlu0 %649
    %v653 = vadd.f32 %v639, %v648
    %v654 = vadd.f32 %v640, %v650
    %s655 = sld [smem:[#allocation2 + $0x36]]
    %v656 = vstv %s655
    %v657 = vmul.f32 %v611, %v656
    %v658 = vmul.f32 %v612, %v656
    %661 = vrot.lane.b32.xlu0 %v657, 126
    %v662 = vpop.permute.xlu0 %661
    %663 = vrot.lane.b32.xlu0 %v658, 126
    %v664 = vpop.permute.xlu0 %663
    %v667 = vadd.f32 %v653, %v662
    %v668 = vadd.f32 %v654, %v664
    %s669 = sld [smem:[#allocation2 + $0x37]]
    %s670 = scalar_lea.vmem %s0, 128
    %v671 = vld [vmem:[%s670] sm:$0x3f]
    %v672 = vld [vmem:[%s670 + $0x8] sm:$0x3f]
    %v673 = vstv %s669
    %v674 = vmul.f32 %v671, %v673
    %v675 = vmul.f32 %v672, %v673
    %v676 = vadd.f32 %v667, %v674
    %v677 = vadd.f32 %v668, %v675
    %s678 = sld [smem:[#allocation2 + $0x38]]
    %s679 = scalar_lea.vmem %s0, 176
    %v680 = vld [vmem:[%s679] sm:$0x3f]
    %v681 = vld [vmem:[%s679 + $0x8] sm:$0x3f]
    %v682 = vstv %s678
    %v683 = vmul.f32 %v680, %v682
    %v684 = vmul.f32 %v681, %v682
    %v685 = vadd.f32 %v676, %v683
    %v686 = vadd.f32 %v677, %v684
    %s687 = sld [smem:[#allocation2 + $0x39]]
    %v688 = vstv %s687
    %v689 = vmul.f32 %v671, %v688
    %v690 = vmul.f32 %v672, %v688
    %693 = vrot.lane.b32.xlu0 %v689, 127
    %v694 = vpop.permute.xlu0 %693
    %695 = vrot.lane.b32.xlu0 %v690, 127
    %v696 = vpop.permute.xlu0 %695
    %v699 = vadd.f32 %v685, %v694
    %v700 = vadd.f32 %v686, %v696
    %s701 = sld [smem:[#allocation2 + $0x3a]]
    %v702 = vstv %s701
    %v703 = vmul.f32 %v680, %v702
    %v704 = vmul.f32 %v681, %v702
    %707 = vrot.lane.b32.xlu0 %v703, 127
    %v708 = vpop.permute.xlu0 %707
    %709 = vrot.lane.b32.xlu0 %v704, 127
    %v710 = vpop.permute.xlu0 %709
    %v713 = vadd.f32 %v699, %v708
    %v714 = vadd.f32 %v700, %v710
    %s715 = sld [smem:[#allocation2 + $0x3b]]
    %v716 = vstv %s715
    %v717 = vmul.f32 %v671, %v716
    %v718 = vmul.f32 %v672, %v716
    %721 = vrot.lane.b32.xlu0 %v717, 126
    %v722 = vpop.permute.xlu0 %721
    %723 = vrot.lane.b32.xlu0 %v718, 126
    %v724 = vpop.permute.xlu0 %723
    %v727 = vadd.f32 %v713, %v722
    %v728 = vadd.f32 %v714, %v724
    %s729 = sld [smem:[#allocation2 + $0x3c]]
    %v730 = vld [vmem:[%s610 + $0x1] sm:$0x3f]
    %v731 = vld [vmem:[%s610 + $0x9] sm:$0x3f]
    %v732 = vstv %s729
    %v733 = vmul.f32 %v730, %v732
    %v734 = vmul.f32 %v731, %v732
    %v735 = vadd.f32 %v727, %v733
    %v736 = vadd.f32 %v728, %v734
    %s737 = sld [smem:[#allocation2 + $0x3d]]
    %v738 = vld [vmem:[%s619 + $0x1] sm:$0x3f]
    %v739 = vld [vmem:[%s619 + $0x9] sm:$0x3f]
    %v740 = vstv %s737
    %v741 = vmul.f32 %v738, %v740
    %v742 = vmul.f32 %v739, %v740
    %v743 = vadd.f32 %v735, %v741
    %v744 = vadd.f32 %v736, %v742
    %s745 = sld [smem:[#allocation2 + $0x3e]]
    %v746 = vstv %s745
    %v747 = vmul.f32 %v730, %v746
    %v748 = vmul.f32 %v731, %v746
    %751 = vrot.lane.b32.xlu0 %v747, 127
    %v752 = vpop.permute.xlu0 %751
    %753 = vrot.lane.b32.xlu0 %v748, 127
    %v754 = vpop.permute.xlu0 %753
    %v757 = vadd.f32 %v743, %v752
    %v758 = vadd.f32 %v744, %v754
    %s759 = sld [smem:[#allocation2 + $0x3f]]
    %v760 = vstv %s759
    %v761 = vmul.f32 %v738, %v760
    %v762 = vmul.f32 %v739, %v760
    %765 = vrot.lane.b32.xlu0 %v761, 127
    %v766 = vpop.permute.xlu0 %765
    %767 = vrot.lane.b32.xlu0 %v762, 127
    %v768 = vpop.permute.xlu0 %767
    %v771 = vadd.f32 %v757, %v766
    %v772 = vadd.f32 %v758, %v768
    %s773 = sld [smem:[#allocation2 + $0x40]]
    %v774 = vstv %s773
    %v775 = vmul.f32 %v730, %v774
    %v776 = vmul.f32 %v731, %v774
    %779 = vrot.lane.b32.xlu0 %v775, 126
    %v780 = vpop.permute.xlu0 %779
    %781 = vrot.lane.b32.xlu0 %v776, 126
    %v782 = vpop.permute.xlu0 %781
    %v785 = vadd.f32 %v771, %v780
    %v786 = vadd.f32 %v772, %v782
    %s787 = sld [smem:[#allocation2 + $0x41]]
    %v788 = vld [vmem:[%s670 + $0x1] sm:$0x3f]
    %v789 = vld [vmem:[%s670 + $0x9] sm:$0x3f]
    %v790 = vstv %s787
    %v791 = vmul.f32 %v788, %v790
    %v792 = vmul.f32 %v789, %v790
    %v793 = vadd.f32 %v785, %v791
    %v794 = vadd.f32 %v786, %v792
    %s795 = sld [smem:[#allocation2 + $0x42]]
    %v796 = vld [vmem:[%s679 + $0x1] sm:$0x3f]
    %v797 = vld [vmem:[%s679 + $0x9] sm:$0x3f]
    %v798 = vstv %s795
    %v799 = vmul.f32 %v796, %v798
    %v800 = vmul.f32 %v797, %v798
    %v801 = vadd.f32 %v793, %v799
    %v802 = vadd.f32 %v794, %v800
    %s803 = sld [smem:[#allocation2 + $0x43]]
    %v804 = vstv %s803
    %v805 = vmul.f32 %v788, %v804
    %v806 = vmul.f32 %v789, %v804
    %809 = vrot.lane.b32.xlu0 %v805, 127
    %v810 = vpop.permute.xlu0 %809
    %811 = vrot.lane.b32.xlu0 %v806, 127
    %v812 = vpop.permute.xlu0 %811
    %v815 = vadd.f32 %v801, %v810
    %v816 = vadd.f32 %v802, %v812
    %s817 = sld [smem:[#allocation2 + $0x44]]
    %v818 = vstv %s817
    %v819 = vmul.f32 %v796, %v818
    %v820 = vmul.f32 %v797, %v818
    %823 = vrot.lane.b32.xlu0 %v819, 127
    %v824 = vpop.permute.xlu0 %823
    %825 = vrot.lane.b32.xlu0 %v820, 127
    %v826 = vpop.permute.xlu0 %825
    %v829 = vadd.f32 %v815, %v824
    %v830 = vadd.f32 %v816, %v826
    %s831 = sld [smem:[#allocation2 + $0x45]]
    %v832 = vstv %s831
    %v833 = vmul.f32 %v788, %v832
    %v834 = vmul.f32 %v789, %v832
    %837 = vrot.lane.b32.xlu0 %v833, 126
    %v838 = vpop.permute.xlu0 %837
    %839 = vrot.lane.b32.xlu0 %v834, 126
    %v840 = vpop.permute.xlu0 %839
    %v843 = vadd.f32 %v829, %v838
    %v844 = vadd.f32 %v830, %v840
    %s845 = sld [smem:[#allocation2 + $0x46]]
    %v846 = vld [vmem:[%s610 + $0x2] sm:$0x3f]
    %v847 = vld [vmem:[%s610 + $0xa] sm:$0x3f]
    %v848 = vstv %s845
    %v849 = vmul.f32 %v846, %v848
    %v850 = vmul.f32 %v847, %v848
    %v851 = vadd.f32 %v843, %v849
    %v852 = vadd.f32 %v844, %v850
    %s853 = sld [smem:[#allocation2 + $0x47]]
    %v854 = vld [vmem:[%s619 + $0x2] sm:$0x3f]
    %v855 = vld [vmem:[%s619 + $0xa] sm:$0x3f]
    %v856 = vstv %s853
    %v857 = vmul.f32 %v854, %v856
    %v858 = vmul.f32 %v855, %v856
    %v859 = vadd.f32 %v851, %v857
    %v860 = vadd.f32 %v852, %v858
    %s861 = sld [smem:[#allocation2 + $0x48]]
    %v862 = vstv %s861
    %v863 = vmul.f32 %v846, %v862
    %v864 = vmul.f32 %v847, %v862
    %867 = vrot.lane.b32.xlu0 %v863, 127
    %v868 = vpop.permute.xlu0 %867
    %869 = vrot.lane.b32.xlu0 %v864, 127
    %v870 = vpop.permute.xlu0 %869
    %v873 = vadd.f32 %v859, %v868
    %v874 = vadd.f32 %v860, %v870
    %s875 = sld [smem:[#allocation2 + $0x49]]
    %v876 = vstv %s875
    %v877 = vmul.f32 %v854, %v876
    %v878 = vmul.f32 %v855, %v876
    %881 = vrot.lane.b32.xlu0 %v877, 127
    %v882 = vpop.permute.xlu0 %881
    %883 = vrot.lane.b32.xlu0 %v878, 127
    %v884 = vpop.permute.xlu0 %883
    %v887 = vadd.f32 %v873, %v882
    %v888 = vadd.f32 %v874, %v884
    %s889 = sld [smem:[#allocation2 + $0x4a]]
    %v890 = vstv %s889
    %v891 = vmul.f32 %v846, %v890
    %v892 = vmul.f32 %v847, %v890
    %895 = vrot.lane.b32.xlu0 %v891, 126
    %v896 = vpop.permute.xlu0 %895
    %897 = vrot.lane.b32.xlu0 %v892, 126
    %v898 = vpop.permute.xlu0 %897
    %v901 = vadd.f32 %v887, %v896
    %v902 = vadd.f32 %v888, %v898
    %s903 = sld [smem:[#allocation2 + $0x4b]]
    %v904 = vstv %s903
    %v905 = vadd.f32 %v901, %v904
    %v906 = vadd.f32 %v902, %v904
    %v907 = vxor.u32 %v905, 2147483648
    %v908 = vxor.u32 %v906, 2147483648
    %v909 = vmul.f32 %v907, 1.442695
    %v910 = vpow.pop %v909
    %v911 = vmul.f32 %v908, 1.442695
    %v912 = vpow.pop %v911
    %v913 = vadd.f32 %v910, 1.0
    %v914 = vadd.f32 %v912, 1.0
    %v915 = vrcp.pop %v913
    %v916 = vmul.f32 1.0, %v915
    %v917 = vrcp.pop %v914
    %v918 = vmul.f32 1.0, %v917
    %vm919 = vcmask 46080
    %920 = vst.msk [vmem:[%s2] sm:$0x3f] %vm919, %v916
    %921 = vst.msk [vmem:[%s2 + $0x8] sm:$0x3f] %vm919, %v918
    // Predicated region
    $region14: #{model_forward.1} parent=1 // pred_check
      _
    $region15: #{model_forward.1} parent=1 // pred_check_branch
      %923 = sbr.rel (0) target = $region17
    $region16: #{model_forward.1} parent=1 // pred_region
      _
    $region17: #{model_forward.1} parent=1 // pred_fallthru
      _
    // Predicated region
    $region18: #{model_forward.1} parent=1 // pred_check
      _
    $region19: #{model_forward.1} parent=1 // pred_check_branch
      %925 = sbr.rel (0) target = $region21
    $region20: #{model_forward.1} parent=1 // pred_region
      _
    $region21: #{model_forward.1} parent=1 // pred_fallthru
      _
    %926 = vsyncpa [#allocation3], 1

</llo_original>
